<compile_context>
chip_gen: v7x
topology: tpu7x:2x2x1
jax: 0.10.0
libtpu: 0.0.40
codegen_flags: <defaults>
</compile_context>

<pallas_src>
import jax
import jax.numpy as jnp
from jax import lax
from jax.experimental import pallas as pl
from jax.experimental.pallas import tpu as pltpu


_NEG = -1e30  # "-inf" for masked softmax lanes (exp underflows to exactly 0 in f32)


def _round_up(x, m):
    return (x + m - 1) // m * m


def _vmem_budget():
    """Generation-aware (vmem_limit_bytes, max_batch_tile)."""
    cap = None
    try:
        info = pltpu.get_tpu_info()
        cap = (getattr(info, "vmem_capacity_bytes", None)
               or getattr(info, "vmem_size_bytes", None))
    except Exception:
        cap = None
    if cap is None:                      # unknown generation -> safe defaults
        return 32 * 1024 * 1024, 64
    if cap >= 100 * 1024 * 1024:         # v5e / v6e: 128 MiB physical VMEM
        return 96 * 1024 * 1024, 128
    return 28 * 1024 * 1024, 32          # v7x: 64 MiB per TensorCore


def _pick_batch_tile(Bp, max_tile):
    """Largest multiple-of-8 divisor of Bp (<= max_tile), preferring >= 2 grid steps."""
    cands = [c for c in range(8, min(Bp, max_tile) + 1, 8) if Bp % c == 0]
    if not cands:
        return Bp
    multi = [c for c in cands if Bp // c >= 2]   # megacore / pipelining want nb >= 2
    return max(multi) if multi else max(cands)


def _pick_p_chunk(Pp, max_chunk=32):
    """Largest multiple-of-8 divisor of Pp (<= max_chunk)."""
    pc = 8
    c = 16
    while c <= min(Pp, max_chunk):
        if Pp % c == 0:
            pc = c
        c += 8
    return pc


def _make_kernel(P, PC, n_chunks):
    f32, bf16 = jnp.float32, jnp.bfloat16

    def kernel(spatial_ref, dec_ref, st_ref,
               w_v_ref, b_v_ref,
               w_sa_ref, b_sa_ref,
               w_satt_ref, b_satt_ref,
               w_h_ref, b_h_ref,
               w_hatt_ref, b_hatt_ref,
               w_alpha_ref,
               w_ch_ref, b_ch_ref,
               out_ref, attw_ref):
        TB, H = dec_ref.shape
        A = w_v_ref.shape[1]
        PP = attw_ref.shape[1]

        # ---- small MXU projections (bf16 operands, f32 accumulation) ----------
        sen_aff = jnp.maximum(
            jnp.dot(st_ref[...].astype(bf16), w_sa_ref[...],
                    preferred_element_type=f32) + b_sa_ref[...], 0.0)           # (TB,H)
        sen_attn = (jnp.dot(sen_aff.astype(bf16), w_satt_ref[...],
                            preferred_element_type=f32) + b_satt_ref[...])      # (TB,A)
        hid_aff = jnp.tanh(
            jnp.dot(dec_ref[...].astype(bf16), w_h_ref[...],
                    preferred_element_type=f32) + b_h_ref[...])                 # (TB,H)
        hid_attn = (jnp.dot(hid_aff.astype(bf16), w_hatt_ref[...],
                            preferred_element_type=f32) + b_hatt_ref[...])      # (TB,A)

        w_alpha = w_alpha_ref[...]                                               # (1,A) f32
        hid_attn_b = hid_attn[:, None, :]                                        # hoisted broadcast

        # ---- visual path chunked over P: only (TB,PC) alphas survive ----------
        alpha_parts = []
        for c in range(n_chunks):
            sp_c = spatial_ref[:, c * PC:(c + 1) * PC, :]                        # (TB,PC,H) bf16
            v_c = (jnp.dot(sp_c.reshape(TB * PC, H), w_v_ref[...],
                           preferred_element_type=f32)
                   + b_v_ref[...]).reshape(TB, PC, A)
            attn_c = jnp.tanh(v_c + hid_attn_b)                                  # (TB,PC,A)
            alpha_parts.append(jnp.sum(attn_c * w_alpha[None, :, :], axis=-1))   # (TB,PC)

        attn_sent = jnp.tanh(sen_attn + hid_attn)                                # (TB,A)
        alpha_sent = jnp.sum(attn_sent * w_alpha, axis=-1, keepdims=True)        # (TB,1)
        # (the alphas-layer bias is a per-row constant: it cancels under softmax)

        Pp = n_chunks * PC
        if PP > Pp:
            alpha_parts.append(jnp.full((TB, PP - Pp), _NEG, f32))
        alpha_pix = jnp.concatenate(alpha_parts, axis=-1)                        # (TB,PP)

        # ---- lane-dense padded softmax over {P pixels, sentinel} ---------------
        lane = lax.broadcasted_iota(jnp.int32, (TB, PP), 1)
        slab = jnp.where(lane < P, alpha_pix,
                         jnp.where(lane == P, alpha_sent, _NEG))
        m = jnp.max(slab, axis=-1, keepdims=True)
        e = jnp.exp(slab - m)
        w = e * (1.0 / jnp.sum(e, axis=-1, keepdims=True))
        attw_ref[...] = w                                                        # full-width store

        # ---- context (chunked, f32 accumulation) + output ----------------------
        context = w[:, P:P + 1] * sen_aff                                        # (TB,H)
        for c in range(n_chunks):
            sp_c = spatial_ref[:, c * PC:(c + 1) * PC, :].astype(f32)            # (TB,PC,H)
            w_c = w[:, c * PC:(c + 1) * PC]                                      # (TB,PC)
            context = context + jnp.sum(sp_c * w_c[:, :, None], axis=1)
        # padded pixel rows are zero (wrapper pads), so their weights add nothing

        out_ref[...] = jnp.tanh(
            jnp.dot((context + hid_aff).astype(bf16), w_ch_ref[...],
                    preferred_element_type=f32) + b_ch_ref[...])

    return kernel


def adaptive_attention(spatial_image, decoder_out, st, params, *, batch_tile=None):
    B, P, H = spatial_image.shape
    A = params["w_v"].shape[1]
    f32, bf16 = jnp.float32, jnp.bfloat16

    vmem_limit, max_tile = _vmem_budget()

    # batch padding + generation-aware tile (prefers >= 2 grid steps)
    Bp = _round_up(B, 8)
    TB = batch_tile
    if TB is None or TB <= 0 or TB % 8 != 0 or Bp % TB != 0:
        TB = _pick_batch_tile(Bp, max_tile)
    nb = Bp // TB

    # pixel padding (multiple of 8) + chunk size dividing padded P
    Pp = _round_up(P, 8)
    PC = _pick_p_chunk(Pp)
    n_chunks = Pp // PC
    PP = _round_up(P + 1, 128)            # lane-dense att_weights slab (PP >= Pp always)

    # pad + cast activations once in the wrapper
    sp = spatial_image.astype(bf16)
    if Pp > P:
        sp = jnp.pad(sp, ((0, 0), (0, Pp - P), (0, 0)))
    dec, stp = decoder_out.astype(f32), st.astype(f32)
    if Bp > B:
        sp = jnp.pad(sp, ((0, Bp - B), (0, 0), (0, 0)))
        dec = jnp.pad(dec, ((0, Bp - B), (0, 0)))
        stp = jnp.pad(stp, ((0, Bp - B), (0, 0)))

    # pre-cast MXU weights once (halves weight DMA + VMEM footprint)
    w_v = params["w_v"].astype(bf16)
    w_sa = params["w_sa"].astype(bf16)
    w_satt = params["w_satt"].astype(bf16)
    w_h = params["w_h"].astype(bf16)
    w_hatt = params["w_hatt"].astype(bf16)
    w_ch = params["w_ch"].astype(bf16)
    w_alpha_row = params["w_alpha"].astype(f32).T             # (1,A): VPU mul + lane reduce

    args = [
        sp, dec, stp,
        w_v, params["b_v"].astype(f32),
        w_sa, params["b_sa"].astype(f32),
        w_satt, params["b_satt"].astype(f32),
        w_h, params["b_h"].astype(f32),
        w_hatt, params["b_hatt"].astype(f32),
        w_alpha_row,
        w_ch, params["b_ch"].astype(f32),
    ]

    kernel = _make_kernel(P, PC, n_chunks)

    out_shape = (jax.ShapeDtypeStruct((Bp, H), f32),
                 jax.ShapeDtypeStruct((Bp, PP), f32))
    out_specs = (pl.BlockSpec((TB, H), lambda i: (i, 0)),
                 pl.BlockSpec((TB, PP), lambda i: (i, 0)))

    flops = (2 * Bp * (Pp * H * A + 3 * H * H + 2 * H * A)
             + 2 * Bp * (Pp + 1) * A + 2 * Bp * (Pp + 1) * H)
    transcendentals = Bp * ((Pp + 1) * A + 2 * H + PP)
    bytes_accessed = (Bp * Pp * H * 2 + 2 * Bp * H * 4            # bf16 spatial + f32 dec/st
                      + (3 * H * H + 3 * H * A) * 2 + A * 4       # bf16 weights + w_alpha
                      + (3 * H + 2 * A) * 4                       # f32 biases
                      + (Bp * H + Bp * PP) * 4)                   # outputs

    def build(single_buffer_weights):
        def resident(x):
            nd = x.ndim
            if single_buffer_weights:
                return pl.BlockSpec(x.shape, lambda i, _nd=nd: (0,) * _nd,
                                    pipeline_mode=pl.Buffered(1))
            return pl.BlockSpec(x.shape, lambda i, _nd=nd: (0,) * _nd)

        in_specs = [
            pl.BlockSpec((TB, Pp, H), lambda i: (i, 0, 0)),       # spatial (bf16)
            pl.BlockSpec((TB, H), lambda i: (i, 0)),              # decoder_out
            pl.BlockSpec((TB, H), lambda i: (i, 0)),              # st
        ] + [resident(a) for a in args[3:]]                       # resident weights/biases

        return pl.pallas_call(
            kernel,
            out_shape=out_shape,
            grid=(nb,),
            in_specs=in_specs,
            out_specs=out_specs,
            compiler_params=pltpu.CompilerParams(
                dimension_semantics=("parallel",),
                vmem_limit_bytes=int(vmem_limit),
            ),
            cost_estimate=pl.CostEstimate(
                flops=int(flops),
                transcendentals=int(transcendentals),
                bytes_accessed=int(bytes_accessed),
            ),
        )

    try:
        out, attw_pad = build(hasattr(pl, "Buffered"))(*args)
    except Exception:
        # fall back to default double-buffered resident weights
        out, attw_pad = build(False)(*args)

    att_weights = attw_pad[:B, :P + 1]
    beta_value = att_weights[:, -1:]
    return out[:B], att_weights, beta_value


def _init_linear(key, fan_in, fan_out):
    # PyTorch nn.Linear default: U(-1/sqrt(fan_in), 1/sqrt(fan_in)) for W and b.
    kw, kb = jax.random.split(key)
    bound = 1.0 / (fan_in ** 0.5)
    w = jax.random.uniform(kw, (fan_in, fan_out), jnp.float32, -bound, bound)
    b = jax.random.uniform(kb, (1, fan_out), jnp.float32, -bound, bound)
    return w, b


def make_params(key, hidden_size, att_dim):
    keys = jax.random.split(key, 7)
    p = {}
    p["w_sa"], p["b_sa"] = _init_linear(keys[0], hidden_size, hidden_size)    # sen_affine
    p["w_satt"], p["b_satt"] = _init_linear(keys[1], hidden_size, att_dim)    # sen_att
    p["w_h"], p["b_h"] = _init_linear(keys[2], hidden_size, hidden_size)      # h_affine
    p["w_hatt"], p["b_hatt"] = _init_linear(keys[3], hidden_size, att_dim)    # h_att
    p["w_v"], p["b_v"] = _init_linear(keys[4], hidden_size, att_dim)          # v_att
    p["w_alpha"], p["b_alpha"] = _init_linear(keys[5], att_dim, 1)            # alphas
    p["w_ch"], p["b_ch"] = _init_linear(keys[6], hidden_size, hidden_size)    # context_hidden
    return p


def adaptive_attention_ref(spatial_image, decoder_out, st, p):
    """Pure-JAX reference mirroring the PyTorch forward (same bf16 matmul precision)."""
    bf16, f32 = jnp.bfloat16, jnp.float32
    B, P, H = spatial_image.shape
    lin = lambda x, w, b: jnp.dot(x.astype(bf16), w.astype(bf16),
                                  preferred_element_type=f32) + b
    visual_attn = lin(spatial_image.reshape(B * P, H), p["w_v"], p["b_v"]).reshape(B, P, -1)
    sen_aff = jax.nn.relu(lin(st, p["w_sa"], p["b_sa"]))
    sen_attn = lin(sen_aff, p["w_satt"], p["b_satt"])
    hid_aff = jnp.tanh(lin(decoder_out, p["w_h"], p["b_h"]))
    hid_attn = lin(hid_aff, p["w_hatt"], p["b_hatt"])
    attended = jnp.concatenate([visual_attn, sen_attn[:, None, :]], axis=1)
    concat_features = jnp.concatenate([spatial_image, sen_aff[:, None, :]], axis=1)
    attention = jnp.tanh(attended + hid_attn[:, None, :])
    alpha = (attention @ p["w_alpha"] + p["b_alpha"])[..., 0]
    att_w = jax.nn.softmax(alpha, axis=1)
    context = jnp.sum(concat_features * att_w[:, :, None], axis=1)
    beta = att_w[:, -1:]
    out = jnp.tanh(lin(context + hid_aff, p["w_ch"], p["b_ch"]))
    return out, att_w, beta


if __name__ == "__main__":
    B, P, H, A = 2, 8, 32, 16  # batch, num_pixels, hidden_size, att_dim

    key = jax.random.PRNGKey(0)
    k_sp, k_dec, k_st, k_par = jax.random.split(key, 4)
    spatial_image = jax.random.normal(k_sp, (B, P, H), jnp.float32)
    decoder_out = jax.random.normal(k_dec, (B, H), jnp.float32)
    st = jax.random.normal(k_st, (B, H), jnp.float32)
    params = make_params(k_par, H, A)

    out_l, att_w, beta = adaptive_attention(spatial_image, decoder_out, st, params)
    jax.block_until_ready((out_l, att_w, beta))

    # sanity-check against the pure-JAX reference (same bf16-matmul precision)
    ref_out, ref_attw, ref_beta = adaptive_attention_ref(
        spatial_image, decoder_out, st, params
    )
    assert out_l.shape == (B, H) and att_w.shape == (B, P + 1) and beta.shape == (B, 1)
    assert jnp.allclose(att_w, ref_attw, atol=1e-3), "att_weights mismatch"
    assert jnp.allclose(beta, ref_beta, atol=1e-3), "beta mismatch"
    assert jnp.allclose(out_l, ref_out, atol=1e-2), "out_l mismatch"

    print("KERNEL_OK")
</pallas_src>

<mosaic_0001>
module attributes {stable_mosaic.version = 11 : i64} {
  func.func @kernel(%arg0: i32, %arg1: memref<8x8x32xbf16, #tpu.memory_space<vmem>>, %arg2: memref<8x32xf32, #tpu.memory_space<vmem>>, %arg3: memref<8x32xf32, #tpu.memory_space<vmem>>, %arg4: memref<32x16xbf16, #tpu.memory_space<vmem>>, %arg5: memref<1x16xf32, #tpu.memory_space<vmem>>, %arg6: memref<32x32xbf16, #tpu.memory_space<vmem>>, %arg7: memref<1x32xf32, #tpu.memory_space<vmem>>, %arg8: memref<32x16xbf16, #tpu.memory_space<vmem>>, %arg9: memref<1x16xf32, #tpu.memory_space<vmem>>, %arg10: memref<32x32xbf16, #tpu.memory_space<vmem>>, %arg11: memref<1x32xf32, #tpu.memory_space<vmem>>, %arg12: memref<32x16xbf16, #tpu.memory_space<vmem>>, %arg13: memref<1x16xf32, #tpu.memory_space<vmem>>, %arg14: memref<1x16xf32, #tpu.memory_space<vmem>>, %arg15: memref<32x32xbf16, #tpu.memory_space<vmem>>, %arg16: memref<1x32xf32, #tpu.memory_space<vmem>>, %arg17: memref<8x32xf32, #tpu.memory_space<vmem>>, %arg18: memref<8x128xf32, #tpu.memory_space<vmem>>) attributes {dimension_semantics = [#tpu.dimension_semantics<parallel>], iteration_bounds = array<i64: 1>, scalar_prefetch = 0 : i64, scratch_operands = 0 : i64, tpu.core_type = #tpu.core_type<tc>, window_params = [{transform_indices = @transform_0, window_bounds = array<i64: 8, 8, 32>}, {transform_indices = @transform_1, window_bounds = array<i64: 8, 32>}, {transform_indices = @transform_2, window_bounds = array<i64: 8, 32>}, {pipeline_mode = #tpu.pipeline_mode<synchronous>, transform_indices = @transform_3, window_bounds = array<i64: 32, 16>}, {pipeline_mode = #tpu.pipeline_mode<synchronous>, transform_indices = @transform_4, window_bounds = array<i64: 1, 16>}, {pipeline_mode = #tpu.pipeline_mode<synchronous>, transform_indices = @transform_5, window_bounds = array<i64: 32, 32>}, {pipeline_mode = #tpu.pipeline_mode<synchronous>, transform_indices = @transform_6, window_bounds = array<i64: 1, 32>}, {pipeline_mode = #tpu.pipeline_mode<synchronous>, transform_indices = @transform_7, window_bounds = array<i64: 32, 16>}, {pipeline_mode = #tpu.pipeline_mode<synchronous>, transform_indices = @transform_8, window_bounds = array<i64: 1, 16>}, {pipeline_mode = #tpu.pipeline_mode<synchronous>, transform_indices = @transform_9, window_bounds = array<i64: 32, 32>}, {pipeline_mode = #tpu.pipeline_mode<synchronous>, transform_indices = @transform_10, window_bounds = array<i64: 1, 32>}, {pipeline_mode = #tpu.pipeline_mode<synchronous>, transform_indices = @transform_11, window_bounds = array<i64: 32, 16>}, {pipeline_mode = #tpu.pipeline_mode<synchronous>, transform_indices = @transform_12, window_bounds = array<i64: 1, 16>}, {pipeline_mode = #tpu.pipeline_mode<synchronous>, transform_indices = @transform_13, window_bounds = array<i64: 1, 16>}, {pipeline_mode = #tpu.pipeline_mode<synchronous>, transform_indices = @transform_14, window_bounds = array<i64: 32, 32>}, {pipeline_mode = #tpu.pipeline_mode<synchronous>, transform_indices = @transform_15, window_bounds = array<i64: 1, 32>}, {transform_indices = @transform_16, window_bounds = array<i64: 8, 32>}, {transform_indices = @transform_17, window_bounds = array<i64: 8, 128>}]} {
    %c0 = arith.constant 0 : index
    %c0_0 = arith.constant 0 : index
    %0 = vector.load %arg3[%c0, %c0_0] : memref<8x32xf32, #tpu.memory_space<vmem>>, vector<8x32xf32>
    %1 = arith.truncf %0 : vector<8x32xf32> to vector<8x32xbf16>
    %c0_1 = arith.constant 0 : index
    %c0_2 = arith.constant 0 : index
    %2 = vector.load %arg6[%c0_1, %c0_2] : memref<32x32xbf16, #tpu.memory_space<vmem>>, vector<32x32xbf16>
    %cst = arith.constant dense<0.000000e+00> : vector<8x32xf32>
    %3 = tpu.matmul %1, %2, %cst {dimension_numbers = #tpu.dot_dimension_numbers<[1], [0], [0], [1], [0, 0, 1, 1], [], []>} : vector<8x32xbf16>, vector<32x32xbf16>, vector<8x32xf32> -> vector<8x32xf32>
    %c0_3 = arith.constant 0 : index
    %c0_4 = arith.constant 0 : index
    %4 = vector.load %arg7[%c0_3, %c0_4] : memref<1x32xf32, #tpu.memory_space<vmem>>, vector<1x32xf32>
    %5 = vector.broadcast %4 : vector<1x32xf32> to vector<8x32xf32>
    %6 = arith.addf %3, %5 : vector<8x32xf32>
    %cst_5 = arith.constant 0.000000e+00 : f32
    %7 = vector.broadcast %cst_5 : f32 to vector<8x32xf32>
    %8 = arith.maximumf %6, %7 : vector<8x32xf32>
    %9 = arith.truncf %8 : vector<8x32xf32> to vector<8x32xbf16>
    %c0_6 = arith.constant 0 : index
    %c0_7 = arith.constant 0 : index
    %10 = vector.load %arg8[%c0_6, %c0_7] : memref<32x16xbf16, #tpu.memory_space<vmem>>, vector<32x16xbf16>
    %cst_8 = arith.constant dense<0.000000e+00> : vector<8x16xf32>
    %11 = tpu.matmul %9, %10, %cst_8 {dimension_numbers = #tpu.dot_dimension_numbers<[1], [0], [0], [1], [0, 0, 1, 1], [], []>} : vector<8x32xbf16>, vector<32x16xbf16>, vector<8x16xf32> -> vector<8x16xf32>
    %c0_9 = arith.constant 0 : index
    %c0_10 = arith.constant 0 : index
    %12 = vector.load %arg9[%c0_9, %c0_10] : memref<1x16xf32, #tpu.memory_space<vmem>>, vector<1x16xf32>
    %13 = vector.broadcast %12 : vector<1x16xf32> to vector<8x16xf32>
    %14 = arith.addf %11, %13 : vector<8x16xf32>
    %c0_11 = arith.constant 0 : index
    %c0_12 = arith.constant 0 : index
    %15 = vector.load %arg2[%c0_11, %c0_12] : memref<8x32xf32, #tpu.memory_space<vmem>>, vector<8x32xf32>
    %16 = arith.truncf %15 : vector<8x32xf32> to vector<8x32xbf16>
    %c0_13 = arith.constant 0 : index
    %c0_14 = arith.constant 0 : index
    %17 = vector.load %arg10[%c0_13, %c0_14] : memref<32x32xbf16, #tpu.memory_space<vmem>>, vector<32x32xbf16>
    %cst_15 = arith.constant dense<0.000000e+00> : vector<8x32xf32>
    %18 = tpu.matmul %16, %17, %cst_15 {dimension_numbers = #tpu.dot_dimension_numbers<[1], [0], [0], [1], [0, 0, 1, 1], [], []>} : vector<8x32xbf16>, vector<32x32xbf16>, vector<8x32xf32> -> vector<8x32xf32>
    %c0_16 = arith.constant 0 : index
    %c0_17 = arith.constant 0 : index
    %19 = vector.load %arg11[%c0_16, %c0_17] : memref<1x32xf32, #tpu.memory_space<vmem>>, vector<1x32xf32>
    %20 = vector.broadcast %19 : vector<1x32xf32> to vector<8x32xf32>
    %21 = arith.addf %18, %20 : vector<8x32xf32>
    %22 = math.tanh %21 : vector<8x32xf32>
    %23 = arith.truncf %22 : vector<8x32xf32> to vector<8x32xbf16>
    %c0_18 = arith.constant 0 : index
    %c0_19 = arith.constant 0 : index
    %24 = vector.load %arg12[%c0_18, %c0_19] : memref<32x16xbf16, #tpu.memory_space<vmem>>, vector<32x16xbf16>
    %cst_20 = arith.constant dense<0.000000e+00> : vector<8x16xf32>
    %25 = tpu.matmul %23, %24, %cst_20 {dimension_numbers = #tpu.dot_dimension_numbers<[1], [0], [0], [1], [0, 0, 1, 1], [], []>} : vector<8x32xbf16>, vector<32x16xbf16>, vector<8x16xf32> -> vector<8x16xf32>
    %c0_21 = arith.constant 0 : index
    %c0_22 = arith.constant 0 : index
    %26 = vector.load %arg13[%c0_21, %c0_22] : memref<1x16xf32, #tpu.memory_space<vmem>>, vector<1x16xf32>
    %27 = vector.broadcast %26 : vector<1x16xf32> to vector<8x16xf32>
    %28 = arith.addf %25, %27 : vector<8x16xf32>
    %c0_23 = arith.constant 0 : index
    %c0_24 = arith.constant 0 : index
    %29 = vector.load %arg14[%c0_23, %c0_24] : memref<1x16xf32, #tpu.memory_space<vmem>>, vector<1x16xf32>
    %30 = vector.shape_cast %28 : vector<8x16xf32> to vector<8x1x16xf32>
    %c0_25 = arith.constant 0 : index
    %c0_26 = arith.constant 0 : index
    %c0_27 = arith.constant 0 : index
    %31 = vector.load %arg1[%c0_25, %c0_26, %c0_27] : memref<8x8x32xbf16, #tpu.memory_space<vmem>>, vector<8x8x32xbf16>
    %32 = vector.shape_cast %31 : vector<8x8x32xbf16> to vector<64x32xbf16>
    %c0_28 = arith.constant 0 : index
    %c0_29 = arith.constant 0 : index
    %33 = vector.load %arg4[%c0_28, %c0_29] : memref<32x16xbf16, #tpu.memory_space<vmem>>, vector<32x16xbf16>
    %cst_30 = arith.constant dense<0.000000e+00> : vector<64x16xf32>
    %34 = tpu.matmul %32, %33, %cst_30 {dimension_numbers = #tpu.dot_dimension_numbers<[1], [0], [0], [1], [0, 0, 1, 1], [], []>} : vector<64x32xbf16>, vector<32x16xbf16>, vector<64x16xf32> -> vector<64x16xf32>
    %c0_31 = arith.constant 0 : index
    %c0_32 = arith.constant 0 : index
    %35 = vector.load %arg5[%c0_31, %c0_32] : memref<1x16xf32, #tpu.memory_space<vmem>>, vector<1x16xf32>
    %36 = vector.broadcast %35 : vector<1x16xf32> to vector<64x16xf32>
    %37 = arith.addf %34, %36 : vector<64x16xf32>
    %38 = vector.shape_cast %37 : vector<64x16xf32> to vector<8x8x16xf32>
    %39 = vector.broadcast %30 : vector<8x1x16xf32> to vector<8x8x16xf32>
    %40 = arith.addf %38, %39 : vector<8x8x16xf32>
    %41 = math.tanh %40 : vector<8x8x16xf32>
    %42 = vector.shape_cast %29 : vector<1x16xf32> to vector<1x1x16xf32>
    %43 = vector.broadcast %42 : vector<1x1x16xf32> to vector<8x8x16xf32>
    %44 = arith.mulf %41, %43 : vector<8x8x16xf32>
    %cst_33 = arith.constant dense<0.000000e+00> : vector<8x8xf32>
    %45 = vector.multi_reduction <add>, %44, %cst_33 [2] : vector<8x8x16xf32> to vector<8x8xf32>
    %46 = arith.addf %14, %28 : vector<8x16xf32>
    %47 = math.tanh %46 : vector<8x16xf32>
    %48 = vector.broadcast %29 : vector<1x16xf32> to vector<8x16xf32>
    %49 = arith.mulf %47, %48 : vector<8x16xf32>
    %cst_34 = arith.constant dense<0.000000e+00> : vector<8xf32>
    %50 = vector.multi_reduction <add>, %49, %cst_34 [1] : vector<8x16xf32> to vector<8xf32>
    %51 = vector.shape_cast %50 : vector<8xf32> to vector<8x1xf32>
    %cst_35 = arith.constant -1.000000e+30 : f32
    %52 = vector.broadcast %cst_35 : f32 to vector<8x120xf32>
    %53 = tpu.concatenate %45, %52 in 1 : vector<8x8xf32>, vector<8x120xf32> -> vector<8x128xf32>
    %54 = tpu.iota {dimensions = array<i32: 1>} : vector<8x128xi32>
    %c8_i32 = arith.constant 8 : i32
    %55 = vector.broadcast %c8_i32 : i32 to vector<8x128xi32>
    %56 = arith.cmpi slt, %54, %55 : vector<8x128xi32>
    %c8_i32_36 = arith.constant 8 : i32
    %57 = vector.broadcast %c8_i32_36 : i32 to vector<8x128xi32>
    %58 = arith.cmpi eq, %54, %57 : vector<8x128xi32>
    %cst_37 = arith.constant -1.000000e+30 : f32
    %59 = vector.shape_cast %51 : vector<8x1xf32> to vector<8x1xf32>
    %60 = vector.broadcast %59 : vector<8x1xf32> to vector<8x128xf32>
    %61 = vector.broadcast %cst_37 : f32 to vector<8x128xf32>
    %62 = arith.select %58, %60, %61 : vector<8x128xi1>, vector<8x128xf32>
    %63 = arith.select %56, %53, %62 : vector<8x128xi1>, vector<8x128xf32>
    %cst_38 = arith.constant dense<0xFF800000> : vector<8xf32>
    %64 = vector.multi_reduction <maximumf>, %63, %cst_38 [1] : vector<8x128xf32> to vector<8xf32>
    %65 = vector.shape_cast %64 : vector<8xf32> to vector<8x1xf32>
    %66 = vector.broadcast %65 : vector<8x1xf32> to vector<8x128xf32>
    %67 = arith.subf %63, %66 : vector<8x128xf32>
    %68 = math.exp %67 : vector<8x128xf32>
    %cst_39 = arith.constant dense<0.000000e+00> : vector<8xf32>
    %69 = vector.multi_reduction <add>, %68, %cst_39 [1] : vector<8x128xf32> to vector<8xf32>
    %70 = vector.shape_cast %69 : vector<8xf32> to vector<8x1xf32>
    %cst_40 = arith.constant 1.000000e+00 : f32
    %71 = vector.broadcast %cst_40 : f32 to vector<8x1xf32>
    %72 = arith.divf %71, %70 : vector<8x1xf32>
    %73 = vector.broadcast %72 : vector<8x1xf32> to vector<8x128xf32>
    %74 = arith.mulf %68, %73 : vector<8x128xf32>
    %c0_41 = arith.constant 0 : index
    %c0_42 = arith.constant 0 : index
    %75 = vector.load %arg18[%c0_41, %c0_42] : memref<8x128xf32, #tpu.memory_space<vmem>>, vector<8x128xf32>
    tpu.vector_store %arg18[%c0_41, %c0_42], %74 {strides = array<i32>} : memref<8x128xf32, #tpu.memory_space<vmem>>, vector<8x128xf32>,
    %76 = vector.extract_strided_slice %74 {offsets = [0, 8], sizes = [8, 1], strides = [1, 1]} : vector<8x128xf32> to vector<8x1xf32>
    %77 = vector.broadcast %76 : vector<8x1xf32> to vector<8x32xf32>
    %78 = arith.mulf %77, %8 : vector<8x32xf32>
    %c0_43 = arith.constant 0 : index
    %c0_44 = arith.constant 0 : index
    %c0_45 = arith.constant 0 : index
    %79 = vector.load %arg1[%c0_43, %c0_44, %c0_45] : memref<8x8x32xbf16, #tpu.memory_space<vmem>>, vector<8x8x32xbf16>
    %80 = arith.extf %79 : vector<8x8x32xbf16> to vector<8x8x32xf32>
    %81 = vector.extract_strided_slice %74 {offsets = [0, 0], sizes = [8, 8], strides = [1, 1]} : vector<8x128xf32> to vector<8x8xf32>
    %82 = vector.shape_cast %81 : vector<8x8xf32> to vector<8x8x1xf32>
    %83 = vector.broadcast %82 : vector<8x8x1xf32> to vector<8x8x32xf32>
    %84 = arith.mulf %80, %83 : vector<8x8x32xf32>
    %cst_46 = arith.constant dense<0.000000e+00> : vector<8x32xf32>
    %85 = vector.multi_reduction <add>, %84, %cst_46 [1] : vector<8x8x32xf32> to vector<8x32xf32>
    %86 = arith.addf %78, %85 : vector<8x32xf32>
    %87 = arith.addf %86, %22 : vector<8x32xf32>
    %88 = arith.truncf %87 : vector<8x32xf32> to vector<8x32xbf16>
    %c0_47 = arith.constant 0 : index
    %c0_48 = arith.constant 0 : index
    %89 = vector.load %arg15[%c0_47, %c0_48] : memref<32x32xbf16, #tpu.memory_space<vmem>>, vector<32x32xbf16>
    %cst_49 = arith.constant dense<0.000000e+00> : vector<8x32xf32>
    %90 = tpu.matmul %88, %89, %cst_49 {dimension_numbers = #tpu.dot_dimension_numbers<[1], [0], [0], [1], [0, 0, 1, 1], [], []>} : vector<8x32xbf16>, vector<32x32xbf16>, vector<8x32xf32> -> vector<8x32xf32>
    %c0_50 = arith.constant 0 : index
    %c0_51 = arith.constant 0 : index
    %91 = vector.load %arg16[%c0_50, %c0_51] : memref<1x32xf32, #tpu.memory_space<vmem>>, vector<1x32xf32>
    %92 = vector.broadcast %91 : vector<1x32xf32> to vector<8x32xf32>
    %93 = arith.addf %90, %92 : vector<8x32xf32>
    %94 = math.tanh %93 : vector<8x32xf32>
    %c0_52 = arith.constant 0 : index
    %c0_53 = arith.constant 0 : index
    %95 = vector.load %arg17[%c0_52, %c0_53] : memref<8x32xf32, #tpu.memory_space<vmem>>, vector<8x32xf32>
    tpu.vector_store %arg17[%c0_52, %c0_53], %94 {strides = array<i32>} : memref<8x32xf32, #tpu.memory_space<vmem>>, vector<8x32xf32>,
    return
  }
  func.func @transform_0(%arg0: i32) -> (i32, i32, i32) {
    %c0_i32 = arith.constant 0 : i32
    %c0_i32_0 = arith.constant 0 : i32
    %c0_i32_1 = arith.constant 0 : i32
    return %arg0, %c0_i32, %c0_i32_0 : i32, i32, i32
  }
  func.func @transform_1(%arg0: i32) -> (i32, i32) {
    %c0_i32 = arith.constant 0 : i32
    %c0_i32_0 = arith.constant 0 : i32
    return %arg0, %c0_i32 : i32, i32
  }
  func.func @transform_2(%arg0: i32) -> (i32, i32) {
    %c0_i32 = arith.constant 0 : i32
    %c0_i32_0 = arith.constant 0 : i32
    return %arg0, %c0_i32 : i32, i32
  }
  func.func @transform_3(%arg0: i32) -> (i32, i32) {
    %c0_i32 = arith.constant 0 : i32
    %c0_i32_0 = arith.constant 0 : i32
    %c0_i32_1 = arith.constant 0 : i32
    return %c0_i32, %c0_i32_0 : i32, i32
  }
  func.func @transform_4(%arg0: i32) -> (i32, i32) {
    %c0_i32 = arith.constant 0 : i32
    %c0_i32_0 = arith.constant 0 : i32
    %c0_i32_1 = arith.constant 0 : i32
    return %c0_i32, %c0_i32_0 : i32, i32
  }
  func.func @transform_5(%arg0: i32) -> (i32, i32) {
    %c0_i32 = arith.constant 0 : i32
    %c0_i32_0 = arith.constant 0 : i32
    %c0_i32_1 = arith.constant 0 : i32
    return %c0_i32, %c0_i32_0 : i32, i32
  }
  func.func @transform_6(%arg0: i32) -> (i32, i32) {
    %c0_i32 = arith.constant 0 : i32
    %c0_i32_0 = arith.constant 0 : i32
    %c0_i32_1 = arith.constant 0 : i32
    return %c0_i32, %c0_i32_0 : i32, i32
  }
  func.func @transform_7(%arg0: i32) -> (i32, i32) {
    %c0_i32 = arith.constant 0 : i32
    %c0_i32_0 = arith.constant 0 : i32
    %c0_i32_1 = arith.constant 0 : i32
    return %c0_i32, %c0_i32_0 : i32, i32
  }
  func.func @transform_8(%arg0: i32) -> (i32, i32) {
    %c0_i32 = arith.constant 0 : i32
    %c0_i32_0 = arith.constant 0 : i32
    %c0_i32_1 = arith.constant 0 : i32
    return %c0_i32, %c0_i32_0 : i32, i32
  }
  func.func @transform_9(%arg0: i32) -> (i32, i32) {
    %c0_i32 = arith.constant 0 : i32
    %c0_i32_0 = arith.constant 0 : i32
    %c0_i32_1 = arith.constant 0 : i32
    return %c0_i32, %c0_i32_0 : i32, i32
  }
  func.func @transform_10(%arg0: i32) -> (i32, i32) {
    %c0_i32 = arith.constant 0 : i32
    %c0_i32_0 = arith.constant 0 : i32
    %c0_i32_1 = arith.constant 0 : i32
    return %c0_i32, %c0_i32_0 : i32, i32
  }
  func.func @transform_11(%arg0: i32) -> (i32, i32) {
    %c0_i32 = arith.constant 0 : i32
    %c0_i32_0 = arith.constant 0 : i32
    %c0_i32_1 = arith.constant 0 : i32
    return %c0_i32, %c0_i32_0 : i32, i32
  }
  func.func @transform_12(%arg0: i32) -> (i32, i32) {
    %c0_i32 = arith.constant 0 : i32
    %c0_i32_0 = arith.constant 0 : i32
    %c0_i32_1 = arith.constant 0 : i32
    return %c0_i32, %c0_i32_0 : i32, i32
  }
  func.func @transform_13(%arg0: i32) -> (i32, i32) {
    %c0_i32 = arith.constant 0 : i32
    %c0_i32_0 = arith.constant 0 : i32
    %c0_i32_1 = arith.constant 0 : i32
    return %c0_i32, %c0_i32_0 : i32, i32
  }
  func.func @transform_14(%arg0: i32) -> (i32, i32) {
    %c0_i32 = arith.constant 0 : i32
    %c0_i32_0 = arith.constant 0 : i32
    %c0_i32_1 = arith.constant 0 : i32
    return %c0_i32, %c0_i32_0 : i32, i32
  }
  func.func @transform_15(%arg0: i32) -> (i32, i32) {
    %c0_i32 = arith.constant 0 : i32
    %c0_i32_0 = arith.constant 0 : i32
    %c0_i32_1 = arith.constant 0 : i32
    return %c0_i32, %c0_i32_0 : i32, i32
  }
  func.func @transform_16(%arg0: i32) -> (i32, i32) {
    %c0_i32 = arith.constant 0 : i32
    %c0_i32_0 = arith.constant 0 : i32
    return %arg0, %c0_i32 : i32, i32
  }
  func.func @transform_17(%arg0: i32) -> (i32, i32) {
    %c0_i32 = arith.constant 0 : i32
    %c0_i32_0 = arith.constant 0 : i32
    return %arg0, %c0_i32 : i32, i32
  }
}

module attributes {stable_mosaic.version = 11 : i64} {
  func.func @kernel(%arg0: i32, %arg1: memref<8x8x32xbf16, #tpu.memory_space<vmem>>, %arg2: memref<8x32xf32, #tpu.memory_space<vmem>>, %arg3: memref<8x32xf32, #tpu.memory_space<vmem>>, %arg4: memref<32x16xbf16, #tpu.memory_space<vmem>>, %arg5: memref<1x16xf32, #tpu.memory_space<vmem>>, %arg6: memref<32x32xbf16, #tpu.memory_space<vmem>>, %arg7: memref<1x32xf32, #tpu.memory_space<vmem>>, %arg8: memref<32x16xbf16, #tpu.memory_space<vmem>>, %arg9: memref<1x16xf32, #tpu.memory_space<vmem>>, %arg10: memref<32x32xbf16, #tpu.memory_space<vmem>>, %arg11: memref<1x32xf32, #tpu.memory_space<vmem>>, %arg12: memref<32x16xbf16, #tpu.memory_space<vmem>>, %arg13: memref<1x16xf32, #tpu.memory_space<vmem>>, %arg14: memref<1x16xf32, #tpu.memory_space<vmem>>, %arg15: memref<32x32xbf16, #tpu.memory_space<vmem>>, %arg16: memref<1x32xf32, #tpu.memory_space<vmem>>, %arg17: memref<8x32xf32, #tpu.memory_space<vmem>>, %arg18: memref<8x128xf32, #tpu.memory_space<vmem>>) attributes {dimension_semantics = [#tpu.dimension_semantics<parallel>], iteration_bounds = array<i64: 1>, scalar_prefetch = 0 : i64, scratch_operands = 0 : i64, tpu.core_type = #tpu.core_type<tc>, window_params = [{transform_indices = @transform_0, window_bounds = array<i64: 8, 8, 32>}, {transform_indices = @transform_1, window_bounds = array<i64: 8, 32>}, {transform_indices = @transform_2, window_bounds = array<i64: 8, 32>}, {pipeline_mode = #tpu.pipeline_mode<synchronous>, transform_indices = @transform_3, window_bounds = array<i64: 32, 16>}, {pipeline_mode = #tpu.pipeline_mode<synchronous>, transform_indices = @transform_4, window_bounds = array<i64: 1, 16>}, {pipeline_mode = #tpu.pipeline_mode<synchronous>, transform_indices = @transform_5, window_bounds = array<i64: 32, 32>}, {pipeline_mode = #tpu.pipeline_mode<synchronous>, transform_indices = @transform_6, window_bounds = array<i64: 1, 32>}, {pipeline_mode = #tpu.pipeline_mode<synchronous>, transform_indices = @transform_7, window_bounds = array<i64: 32, 16>}, {pipeline_mode = #tpu.pipeline_mode<synchronous>, transform_indices = @transform_8, window_bounds = array<i64: 1, 16>}, {pipeline_mode = #tpu.pipeline_mode<synchronous>, transform_indices = @transform_9, window_bounds = array<i64: 32, 32>}, {pipeline_mode = #tpu.pipeline_mode<synchronous>, transform_indices = @transform_10, window_bounds = array<i64: 1, 32>}, {pipeline_mode = #tpu.pipeline_mode<synchronous>, transform_indices = @transform_11, window_bounds = array<i64: 32, 16>}, {pipeline_mode = #tpu.pipeline_mode<synchronous>, transform_indices = @transform_12, window_bounds = array<i64: 1, 16>}, {pipeline_mode = #tpu.pipeline_mode<synchronous>, transform_indices = @transform_13, window_bounds = array<i64: 1, 16>}, {pipeline_mode = #tpu.pipeline_mode<synchronous>, transform_indices = @transform_14, window_bounds = array<i64: 32, 32>}, {pipeline_mode = #tpu.pipeline_mode<synchronous>, transform_indices = @transform_15, window_bounds = array<i64: 1, 32>}, {transform_indices = @transform_16, window_bounds = array<i64: 8, 32>}, {transform_indices = @transform_17, window_bounds = array<i64: 8, 128>}]} {
    %c0 = arith.constant 0 : index
    %c0_0 = arith.constant 0 : index
    %0 = vector.load %arg3[%c0, %c0_0] : memref<8x32xf32, #tpu.memory_space<vmem>>, vector<8x32xf32>
    %1 = arith.truncf %0 : vector<8x32xf32> to vector<8x32xbf16>
    %c0_1 = arith.constant 0 : index
    %c0_2 = arith.constant 0 : index
    %2 = vector.load %arg6[%c0_1, %c0_2] : memref<32x32xbf16, #tpu.memory_space<vmem>>, vector<32x32xbf16>
    %cst = arith.constant dense<0.000000e+00> : vector<8x32xf32>
    %3 = tpu.matmul %1, %2, %cst {dimension_numbers = #tpu.dot_dimension_numbers<[1], [0], [0], [1], [0, 0, 1, 1], [], []>} : vector<8x32xbf16>, vector<32x32xbf16>, vector<8x32xf32> -> vector<8x32xf32>
    %c0_3 = arith.constant 0 : index
    %c0_4 = arith.constant 0 : index
    %4 = vector.load %arg7[%c0_3, %c0_4] : memref<1x32xf32, #tpu.memory_space<vmem>>, vector<1x32xf32>
    %5 = vector.broadcast %4 : vector<1x32xf32> to vector<8x32xf32>
    %6 = arith.addf %3, %5 : vector<8x32xf32>
    %cst_5 = arith.constant 0.000000e+00 : f32
    %7 = vector.broadcast %cst_5 : f32 to vector<8x32xf32>
    %8 = arith.maximumf %6, %7 : vector<8x32xf32>
    %9 = arith.truncf %8 : vector<8x32xf32> to vector<8x32xbf16>
    %c0_6 = arith.constant 0 : index
    %c0_7 = arith.constant 0 : index
    %10 = vector.load %arg8[%c0_6, %c0_7] : memref<32x16xbf16, #tpu.memory_space<vmem>>, vector<32x16xbf16>
    %cst_8 = arith.constant dense<0.000000e+00> : vector<8x16xf32>
    %11 = tpu.matmul %9, %10, %cst_8 {dimension_numbers = #tpu.dot_dimension_numbers<[1], [0], [0], [1], [0, 0, 1, 1], [], []>} : vector<8x32xbf16>, vector<32x16xbf16>, vector<8x16xf32> -> vector<8x16xf32>
    %c0_9 = arith.constant 0 : index
    %c0_10 = arith.constant 0 : index
    %12 = vector.load %arg9[%c0_9, %c0_10] : memref<1x16xf32, #tpu.memory_space<vmem>>, vector<1x16xf32>
    %13 = vector.broadcast %12 : vector<1x16xf32> to vector<8x16xf32>
    %14 = arith.addf %11, %13 : vector<8x16xf32>
    %c0_11 = arith.constant 0 : index
    %c0_12 = arith.constant 0 : index
    %15 = vector.load %arg2[%c0_11, %c0_12] : memref<8x32xf32, #tpu.memory_space<vmem>>, vector<8x32xf32>
    %16 = arith.truncf %15 : vector<8x32xf32> to vector<8x32xbf16>
    %c0_13 = arith.constant 0 : index
    %c0_14 = arith.constant 0 : index
    %17 = vector.load %arg10[%c0_13, %c0_14] : memref<32x32xbf16, #tpu.memory_space<vmem>>, vector<32x32xbf16>
    %cst_15 = arith.constant dense<0.000000e+00> : vector<8x32xf32>
    %18 = tpu.matmul %16, %17, %cst_15 {dimension_numbers = #tpu.dot_dimension_numbers<[1], [0], [0], [1], [0, 0, 1, 1], [], []>} : vector<8x32xbf16>, vector<32x32xbf16>, vector<8x32xf32> -> vector<8x32xf32>
    %c0_16 = arith.constant 0 : index
    %c0_17 = arith.constant 0 : index
    %19 = vector.load %arg11[%c0_16, %c0_17] : memref<1x32xf32, #tpu.memory_space<vmem>>, vector<1x32xf32>
    %20 = vector.broadcast %19 : vector<1x32xf32> to vector<8x32xf32>
    %21 = arith.addf %18, %20 : vector<8x32xf32>
    %22 = math.tanh %21 : vector<8x32xf32>
    %23 = arith.truncf %22 : vector<8x32xf32> to vector<8x32xbf16>
    %c0_18 = arith.constant 0 : index
    %c0_19 = arith.constant 0 : index
    %24 = vector.load %arg12[%c0_18, %c0_19] : memref<32x16xbf16, #tpu.memory_space<vmem>>, vector<32x16xbf16>
    %cst_20 = arith.constant dense<0.000000e+00> : vector<8x16xf32>
    %25 = tpu.matmul %23, %24, %cst_20 {dimension_numbers = #tpu.dot_dimension_numbers<[1], [0], [0], [1], [0, 0, 1, 1], [], []>} : vector<8x32xbf16>, vector<32x16xbf16>, vector<8x16xf32> -> vector<8x16xf32>
    %c0_21 = arith.constant 0 : index
    %c0_22 = arith.constant 0 : index
    %26 = vector.load %arg13[%c0_21, %c0_22] : memref<1x16xf32, #tpu.memory_space<vmem>>, vector<1x16xf32>
    %27 = vector.broadcast %26 : vector<1x16xf32> to vector<8x16xf32>
    %28 = arith.addf %25, %27 : vector<8x16xf32>
    %c0_23 = arith.constant 0 : index
    %c0_24 = arith.constant 0 : index
    %29 = vector.load %arg14[%c0_23, %c0_24] : memref<1x16xf32, #tpu.memory_space<vmem>>, vector<1x16xf32>
    %30 = vector.shape_cast %28 : vector<8x16xf32> to vector<8x1x16xf32>
    %c0_25 = arith.constant 0 : index
    %c0_26 = arith.constant 0 : index
    %c0_27 = arith.constant 0 : index
    %31 = vector.load %arg1[%c0_25, %c0_26, %c0_27] : memref<8x8x32xbf16, #tpu.memory_space<vmem>>, vector<8x8x32xbf16>
    %32 = vector.shape_cast %31 : vector<8x8x32xbf16> to vector<64x32xbf16>
    %c0_28 = arith.constant 0 : index
    %c0_29 = arith.constant 0 : index
    %33 = vector.load %arg4[%c0_28, %c0_29] : memref<32x16xbf16, #tpu.memory_space<vmem>>, vector<32x16xbf16>
    %cst_30 = arith.constant dense<0.000000e+00> : vector<64x16xf32>
    %34 = tpu.matmul %32, %33, %cst_30 {dimension_numbers = #tpu.dot_dimension_numbers<[1], [0], [0], [1], [0, 0, 1, 1], [], []>} : vector<64x32xbf16>, vector<32x16xbf16>, vector<64x16xf32> -> vector<64x16xf32>
    %c0_31 = arith.constant 0 : index
    %c0_32 = arith.constant 0 : index
    %35 = vector.load %arg5[%c0_31, %c0_32] : memref<1x16xf32, #tpu.memory_space<vmem>>, vector<1x16xf32>
    %36 = vector.broadcast %35 : vector<1x16xf32> to vector<64x16xf32>
    %37 = arith.addf %34, %36 : vector<64x16xf32>
    %38 = vector.shape_cast %37 : vector<64x16xf32> to vector<8x8x16xf32>
    %39 = vector.broadcast %30 : vector<8x1x16xf32> to vector<8x8x16xf32>
    %40 = arith.addf %38, %39 : vector<8x8x16xf32>
    %41 = math.tanh %40 : vector<8x8x16xf32>
    %42 = vector.shape_cast %29 : vector<1x16xf32> to vector<1x1x16xf32>
    %43 = vector.broadcast %42 : vector<1x1x16xf32> to vector<8x8x16xf32>
    %44 = arith.mulf %41, %43 : vector<8x8x16xf32>
    %cst_33 = arith.constant dense<0.000000e+00> : vector<8x8xf32>
    %45 = vector.multi_reduction <add>, %44, %cst_33 [2] : vector<8x8x16xf32> to vector<8x8xf32>
    %46 = arith.addf %14, %28 : vector<8x16xf32>
    %47 = math.tanh %46 : vector<8x16xf32>
    %48 = vector.broadcast %29 : vector<1x16xf32> to vector<8x16xf32>
    %49 = arith.mulf %47, %48 : vector<8x16xf32>
    %cst_34 = arith.constant dense<0.000000e+00> : vector<8xf32>
    %50 = vector.multi_reduction <add>, %49, %cst_34 [1] : vector<8x16xf32> to vector<8xf32>
    %51 = vector.shape_cast %50 : vector<8xf32> to vector<8x1xf32>
    %cst_35 = arith.constant -1.000000e+30 : f32
    %52 = vector.broadcast %cst_35 : f32 to vector<8x120xf32>
    %53 = tpu.concatenate %45, %52 in 1 : vector<8x8xf32>, vector<8x120xf32> -> vector<8x128xf32>
    %54 = tpu.iota {dimensions = array<i32: 1>} : vector<8x128xi32>
    %c8_i32 = arith.constant 8 : i32
    %55 = vector.broadcast %c8_i32 : i32 to vector<8x128xi32>
    %56 = arith.cmpi slt, %54, %55 : vector<8x128xi32>
    %c8_i32_36 = arith.constant 8 : i32
    %57 = vector.broadcast %c8_i32_36 : i32 to vector<8x128xi32>
    %58 = arith.cmpi eq, %54, %57 : vector<8x128xi32>
    %cst_37 = arith.constant -1.000000e+30 : f32
    %59 = vector.shape_cast %51 : vector<8x1xf32> to vector<8x1xf32>
    %60 = vector.broadcast %59 : vector<8x1xf32> to vector<8x128xf32>
    %61 = vector.broadcast %cst_37 : f32 to vector<8x128xf32>
    %62 = arith.select %58, %60, %61 : vector<8x128xi1>, vector<8x128xf32>
    %63 = arith.select %56, %53, %62 : vector<8x128xi1>, vector<8x128xf32>
    %cst_38 = arith.constant dense<0xFF800000> : vector<8xf32>
    %64 = vector.multi_reduction <maximumf>, %63, %cst_38 [1] : vector<8x128xf32> to vector<8xf32>
    %65 = vector.shape_cast %64 : vector<8xf32> to vector<8x1xf32>
    %66 = vector.broadcast %65 : vector<8x1xf32> to vector<8x128xf32>
    %67 = arith.subf %63, %66 : vector<8x128xf32>
    %68 = math.exp %67 : vector<8x128xf32>
    %cst_39 = arith.constant dense<0.000000e+00> : vector<8xf32>
    %69 = vector.multi_reduction <add>, %68, %cst_39 [1] : vector<8x128xf32> to vector<8xf32>
    %70 = vector.shape_cast %69 : vector<8xf32> to vector<8x1xf32>
    %cst_40 = arith.constant 1.000000e+00 : f32
    %71 = vector.broadcast %cst_40 : f32 to vector<8x1xf32>
    %72 = arith.divf %71, %70 : vector<8x1xf32>
    %73 = vector.broadcast %72 : vector<8x1xf32> to vector<8x128xf32>
    %74 = arith.mulf %68, %73 : vector<8x128xf32>
    %c0_41 = arith.constant 0 : index
    %c0_42 = arith.constant 0 : index
    %75 = vector.load %arg18[%c0_41, %c0_42] : memref<8x128xf32, #tpu.memory_space<vmem>>, vector<8x128xf32>
    tpu.vector_store %arg18[%c0_41, %c0_42], %74 {strides = array<i32>} : memref<8x128xf32, #tpu.memory_space<vmem>>, vector<8x128xf32>,
    %76 = vector.extract_strided_slice %74 {offsets = [0, 8], sizes = [8, 1], strides = [1, 1]} : vector<8x128xf32> to vector<8x1xf32>
    %77 = vector.broadcast %76 : vector<8x1xf32> to vector<8x32xf32>
    %78 = arith.mulf %77, %8 : vector<8x32xf32>
    %c0_43 = arith.constant 0 : index
    %c0_44 = arith.constant 0 : index
    %c0_45 = arith.constant 0 : index
    %79 = vector.load %arg1[%c0_43, %c0_44, %c0_45] : memref<8x8x32xbf16, #tpu.memory_space<vmem>>, vector<8x8x32xbf16>
    %80 = arith.extf %79 : vector<8x8x32xbf16> to vector<8x8x32xf32>
    %81 = vector.extract_strided_slice %74 {offsets = [0, 0], sizes = [8, 8], strides = [1, 1]} : vector<8x128xf32> to vector<8x8xf32>
    %82 = vector.shape_cast %81 : vector<8x8xf32> to vector<8x8x1xf32>
    %83 = vector.broadcast %82 : vector<8x8x1xf32> to vector<8x8x32xf32>
    %84 = arith.mulf %80, %83 : vector<8x8x32xf32>
    %cst_46 = arith.constant dense<0.000000e+00> : vector<8x32xf32>
    %85 = vector.multi_reduction <add>, %84, %cst_46 [1] : vector<8x8x32xf32> to vector<8x32xf32>
    %86 = arith.addf %78, %85 : vector<8x32xf32>
    %87 = arith.addf %86, %22 : vector<8x32xf32>
    %88 = arith.truncf %87 : vector<8x32xf32> to vector<8x32xbf16>
    %c0_47 = arith.constant 0 : index
    %c0_48 = arith.constant 0 : index
    %89 = vector.load %arg15[%c0_47, %c0_48] : memref<32x32xbf16, #tpu.memory_space<vmem>>, vector<32x32xbf16>
    %cst_49 = arith.constant dense<0.000000e+00> : vector<8x32xf32>
    %90 = tpu.matmul %88, %89, %cst_49 {dimension_numbers = #tpu.dot_dimension_numbers<[1], [0], [0], [1], [0, 0, 1, 1], [], []>} : vector<8x32xbf16>, vector<32x32xbf16>, vector<8x32xf32> -> vector<8x32xf32>
    %c0_50 = arith.constant 0 : index
    %c0_51 = arith.constant 0 : index
    %91 = vector.load %arg16[%c0_50, %c0_51] : memref<1x32xf32, #tpu.memory_space<vmem>>, vector<1x32xf32>
    %92 = vector.broadcast %91 : vector<1x32xf32> to vector<8x32xf32>
    %93 = arith.addf %90, %92 : vector<8x32xf32>
    %94 = math.tanh %93 : vector<8x32xf32>
    %c0_52 = arith.constant 0 : index
    %c0_53 = arith.constant 0 : index
    %95 = vector.load %arg17[%c0_52, %c0_53] : memref<8x32xf32, #tpu.memory_space<vmem>>, vector<8x32xf32>
    tpu.vector_store %arg17[%c0_52, %c0_53], %94 {strides = array<i32>} : memref<8x32xf32, #tpu.memory_space<vmem>>, vector<8x32xf32>,
    return
  }
  func.func @transform_0(%arg0: i32) -> (i32, i32, i32) {
    %c0_i32 = arith.constant 0 : i32
    %c0_i32_0 = arith.constant 0 : i32
    %c0_i32_1 = arith.constant 0 : i32
    return %arg0, %c0_i32, %c0_i32_0 : i32, i32, i32
  }
  func.func @transform_1(%arg0: i32) -> (i32, i32) {
    %c0_i32 = arith.constant 0 : i32
    %c0_i32_0 = arith.constant 0 : i32
    return %arg0, %c0_i32 : i32, i32
  }
  func.func @transform_2(%arg0: i32) -> (i32, i32) {
    %c0_i32 = arith.constant 0 : i32
    %c0_i32_0 = arith.constant 0 : i32
    return %arg0, %c0_i32 : i32, i32
  }
  func.func @transform_3(%arg0: i32) -> (i32, i32) {
    %c0_i32 = arith.constant 0 : i32
    %c0_i32_0 = arith.constant 0 : i32
    %c0_i32_1 = arith.constant 0 : i32
    return %c0_i32, %c0_i32_0 : i32, i32
  }
  func.func @transform_4(%arg0: i32) -> (i32, i32) {
    %c0_i32 = arith.constant 0 : i32
    %c0_i32_0 = arith.constant 0 : i32
    %c0_i32_1 = arith.constant 0 : i32
    return %c0_i32, %c0_i32_0 : i32, i32
  }
  func.func @transform_5(%arg0: i32) -> (i32, i32) {
    %c0_i32 = arith.constant 0 : i32
    %c0_i32_0 = arith.constant 0 : i32
    %c0_i32_1 = arith.constant 0 : i32
    return %c0_i32, %c0_i32_0 : i32, i32
  }
  func.func @transform_6(%arg0: i32) -> (i32, i32) {
    %c0_i32 = arith.constant 0 : i32
    %c0_i32_0 = arith.constant 0 : i32
    %c0_i32_1 = arith.constant 0 : i32
    return %c0_i32, %c0_i32_0 : i32, i32
  }
  func.func @transform_7(%arg0: i32) -> (i32, i32) {
    %c0_i32 = arith.constant 0 : i32
    %c0_i32_0 = arith.constant 0 : i32
    %c0_i32_1 = arith.constant 0 : i32
    return %c0_i32, %c0_i32_0 : i32, i32
  }
  func.func @transform_8(%arg0: i32) -> (i32, i32) {
    %c0_i32 = arith.constant 0 : i32
    %c0_i32_0 = arith.constant 0 : i32
    %c0_i32_1 = arith.constant 0 : i32
    return %c0_i32, %c0_i32_0 : i32, i32
  }
  func.func @transform_9(%arg0: i32) -> (i32, i32) {
    %c0_i32 = arith.constant 0 : i32
    %c0_i32_0 = arith.constant 0 : i32
    %c0_i32_1 = arith.constant 0 : i32
    return %c0_i32, %c0_i32_0 : i32, i32
  }
  func.func @transform_10(%arg0: i32) -> (i32, i32) {
    %c0_i32 = arith.constant 0 : i32
    %c0_i32_0 = arith.constant 0 : i32
    %c0_i32_1 = arith.constant 0 : i32
    return %c0_i32, %c0_i32_0 : i32, i32
  }
  func.func @transform_11(%arg0: i32) -> (i32, i32) {
    %c0_i32 = arith.constant 0 : i32
    %c0_i32_0 = arith.constant 0 : i32
    %c0_i32_1 = arith.constant 0 : i32
    return %c0_i32, %c0_i32_0 : i32, i32
  }
  func.func @transform_12(%arg0: i32) -> (i32, i32) {
    %c0_i32 = arith.constant 0 : i32
    %c0_i32_0 = arith.constant 0 : i32
    %c0_i32_1 = arith.constant 0 : i32
    return %c0_i32, %c0_i32_0 : i32, i32
  }
  func.func @transform_13(%arg0: i32) -> (i32, i32) {
    %c0_i32 = arith.constant 0 : i32
    %c0_i32_0 = arith.constant 0 : i32
    %c0_i32_1 = arith.constant 0 : i32
    return %c0_i32, %c0_i32_0 : i32, i32
  }
  func.func @transform_14(%arg0: i32) -> (i32, i32) {
    %c0_i32 = arith.constant 0 : i32
    %c0_i32_0 = arith.constant 0 : i32
    %c0_i32_1 = arith.constant 0 : i32
    return %c0_i32, %c0_i32_0 : i32, i32
  }
  func.func @transform_15(%arg0: i32) -> (i32, i32) {
    %c0_i32 = arith.constant 0 : i32
    %c0_i32_0 = arith.constant 0 : i32
    %c0_i32_1 = arith.constant 0 : i32
    return %c0_i32, %c0_i32_0 : i32, i32
  }
  func.func @transform_16(%arg0: i32) -> (i32, i32) {
    %c0_i32 = arith.constant 0 : i32
    %c0_i32_0 = arith.constant 0 : i32
    return %arg0, %c0_i32 : i32, i32
  }
  func.func @transform_17(%arg0: i32) -> (i32, i32) {
    %c0_i32 = arith.constant 0 : i32
    %c0_i32_0 = arith.constant 0 : i32
    return %arg0, %c0_i32 : i32, i32
  }
}

</mosaic_0001>

<llo_original>
// kernel: tpu_custom_call.1
$region0: #{tpu_custom_call.1}
  #allocation0 [shape = 'u32[]', space=smem, size = 0x4, offset = 0x4, fixed_abs, tag = 'smem constant byte address 0x4 - core index']
  #allocation1 [shape = 'u32[144,128]{1,0:T(1,128)}', space=vmem, size = 0x12000, scoped, tag = 'internal scratch']
  %s0 = inlined_call_operand.vmem [shape: bf16[8,8,32], index: 0, kind: input, shape index: {}]
  %s1 = inlined_call_operand.hbm [shape: f32[8,32], index: 1, kind: input, shape index: {}]
  %s2 = inlined_call_operand.hbm [shape: f32[8,32], index: 2, kind: input, shape index: {}]
  %s3 = inlined_call_operand.vmem [shape: bf16[32,16], index: 3, kind: input, shape index: {}]
  %s4 = inlined_call_operand.vmem [shape: f32[1,16], index: 4, kind: input, shape index: {}]
  %s5 = inlined_call_operand.vmem [shape: bf16[32,32], index: 5, kind: input, shape index: {}]
  %s6 = inlined_call_operand.vmem [shape: f32[1,32], index: 6, kind: input, shape index: {}]
  %s7 = inlined_call_operand.vmem [shape: bf16[32,16], index: 7, kind: input, shape index: {}]
  %s8 = inlined_call_operand.vmem [shape: f32[1,16], index: 8, kind: input, shape index: {}]
  %s9 = inlined_call_operand.vmem [shape: bf16[32,32], index: 9, kind: input, shape index: {}]
  %s10 = inlined_call_operand.vmem [shape: f32[1,32], index: 10, kind: input, shape index: {}]
  %s11 = inlined_call_operand.vmem [shape: bf16[32,16], index: 11, kind: input, shape index: {}]
  %s12 = inlined_call_operand.vmem [shape: f32[1,16], index: 12, kind: input, shape index: {}]
  %s13 = inlined_call_operand.vmem [shape: f32[1,16], index: 13, kind: input, shape index: {}]
  %s14 = inlined_call_operand.vmem [shape: bf16[32,32], index: 14, kind: input, shape index: {}]
  %s15 = inlined_call_operand.vmem [shape: f32[1,32], index: 15, kind: input, shape index: {}]
  %s16 = inlined_call_operand.hbm [shape: f32[8,32], index: 16, kind: output, shape index: {0}]
  %s17 = inlined_call_operand.hbm [shape: f32[8,128], index: 17, kind: output, shape index: {1}]
  %18 = xla_tuple %s16, %s17
  %s19 = sld [smem:[#allocation0]]
  $region90: #{tpu_custom_call.1} parent=0
    _
  %s21 = ssub.s32 1, %s19
  %s22 = scalar_select 0, %s21, %s19
  $region1: #{tpu_custom_call.1} parent=0
    #allocation2 [shape = 'u8[4096]{0}', space=vmem, size = 0x1000, scoped, tag = 'input window, operand 1, single buffered']
    #allocation3 [shape = 's32[1]{0}', space=sflag, size = 0x4, scoped, tag = 'scoped memory for tpu_custom_call.1']
    #allocation4 [shape = 's32[1]{0}', space=sflag, size = 0x4, scoped, tag = 'scoped memory for tpu_custom_call.1']
    #allocation5 [shape = 'u8[4096]{0}', space=vmem, size = 0x1000, scoped, tag = 'input window, operand 2, single buffered']
    #allocation6 [shape = 's32[1]{0}', space=sflag, size = 0x4, scoped, tag = 'scoped memory for tpu_custom_call.1']
    #allocation7 [shape = 'u8[4096]{0}', space=vmem, size = 0x1000, scoped, tag = 'output window, operand 0, single buffered']
    #allocation8 [shape = 'u8[4096]{0}', space=vmem, size = 0x1000, scoped, tag = 'output window, operand 1, single buffered']
    #allocation9 [shape = 's32[1]{0}', space=sflag, size = 0x4, scoped, tag = 'scoped memory for tpu_custom_call.1']
    %23 = vsyncpa [#allocation3], 0
    %24 = vsyncpa [#allocation6], 0
    %25 = vsyncpa [#allocation4], 0
    %26 = vsyncpa [#allocation9], 0
    // Predicated region
    $region2: #{tpu_custom_call.1} parent=1 // pred_check
      _
    $region3: #{tpu_custom_call.1} parent=1 // pred_check_branch
      %28 = sbr.rel (0) target = $region5
    $region4: #{tpu_custom_call.1} parent=1 // pred_region
      _
    $region5: #{tpu_custom_call.1} parent=1 // pred_fallthru
      _
    // Predicated region
    $region6: #{tpu_custom_call.1} parent=1 // pred_check
      _
    $region7: #{tpu_custom_call.1} parent=1 // pred_check_branch
      %30 = sbr.rel (0) target = $region9
    $region8: #{tpu_custom_call.1} parent=1 // pred_region
      %s32 = ssub.s32 128, 128
      %33 = vsyncadd [#allocation3], %s32
      %s35 = sshll.u32 [#allocation2], 4
      %s36 = int_to_ptr.vmem [resolvable:$true] %s35
      %38 = dma.hbm_to_vmem [thread:$0]  %s1, 128, %s36, [#allocation3]
    $region9: #{tpu_custom_call.1} parent=1 // pred_fallthru
      _
    // Predicated region
    $region10: #{tpu_custom_call.1} parent=1 // pred_check
      _
    $region11: #{tpu_custom_call.1} parent=1 // pred_check_branch
      %40 = sbr.rel (0) target = $region13
    $region12: #{tpu_custom_call.1} parent=1 // pred_region
      %s42 = ssub.s32 128, 128
      %43 = vsyncadd [#allocation6], %s42
      %s45 = sshll.u32 [#allocation5], 4
      %s46 = int_to_ptr.vmem [resolvable:$true] %s45
      %48 = dma.hbm_to_vmem [thread:$0]  %s2, 128, %s46, [#allocation6]
    $region13: #{tpu_custom_call.1} parent=1 // pred_fallthru
      _
    // Predicated region
    $region14: #{tpu_custom_call.1} parent=1 // pred_check
      _
    $region15: #{tpu_custom_call.1} parent=1 // pred_check_branch
      %50 = sbr.rel (0) target = $region17
    $region16: #{tpu_custom_call.1} parent=1 // pred_region
      _
    $region17: #{tpu_custom_call.1} parent=1 // pred_fallthru
      _
    // Predicated region
    $region18: #{tpu_custom_call.1} parent=1 // pred_check
      _
    $region19: #{tpu_custom_call.1} parent=1 // pred_check_branch
      %52 = sbr.rel (0) target = $region21
    $region20: #{tpu_custom_call.1} parent=1 // pred_region
      _
    $region21: #{tpu_custom_call.1} parent=1 // pred_fallthru
      _
    // Predicated region
    $region22: #{tpu_custom_call.1} parent=1 // pred_check
      _
    $region23: #{tpu_custom_call.1} parent=1 // pred_check_branch
      %54 = sbr.rel (0) target = $region25
    $region24: #{tpu_custom_call.1} parent=1 // pred_region
      _
    $region25: #{tpu_custom_call.1} parent=1 // pred_fallthru
      _
    // Predicated region
    $region26: #{tpu_custom_call.1} parent=1 // pred_check
      _
    $region27: #{tpu_custom_call.1} parent=1 // pred_check_branch
      %56 = sbr.rel (0) target = $region29
    $region28: #{tpu_custom_call.1} parent=1 // pred_region
      _
    $region29: #{tpu_custom_call.1} parent=1 // pred_fallthru
      _
    // Predicated region
    $region30: #{tpu_custom_call.1} parent=1 // pred_check
      _
    $region31: #{tpu_custom_call.1} parent=1 // pred_check_branch
      %58 = sbr.rel (0) target = $region33
    $region32: #{tpu_custom_call.1} parent=1 // pred_region
      _
    $region33: #{tpu_custom_call.1} parent=1 // pred_fallthru
      _
    // Predicated region
    $region34: #{tpu_custom_call.1} parent=1 // pred_check
      _
    $region35: #{tpu_custom_call.1} parent=1 // pred_check_branch
      %60 = sbr.rel (0) target = $region37
    $region36: #{tpu_custom_call.1} parent=1 // pred_region
      _
    $region37: #{tpu_custom_call.1} parent=1 // pred_fallthru
      _
    // Predicated region
    $region38: #{tpu_custom_call.1} parent=1 // pred_check
      _
    $region39: #{tpu_custom_call.1} parent=1 // pred_check_branch
      %62 = sbr.rel (0) target = $region41
    $region40: #{tpu_custom_call.1} parent=1 // pred_region
      _
    $region41: #{tpu_custom_call.1} parent=1 // pred_fallthru
      _
    // Predicated region
    $region42: #{tpu_custom_call.1} parent=1 // pred_check
      _
    $region43: #{tpu_custom_call.1} parent=1 // pred_check_branch
      %64 = sbr.rel (0) target = $region45
    $region44: #{tpu_custom_call.1} parent=1 // pred_region
      _
    $region45: #{tpu_custom_call.1} parent=1 // pred_fallthru
      _
    // Predicated region
    $region46: #{tpu_custom_call.1} parent=1 // pred_check
      _
    $region47: #{tpu_custom_call.1} parent=1 // pred_check_branch
      %66 = sbr.rel (0) target = $region49
    $region48: #{tpu_custom_call.1} parent=1 // pred_region
      _
    $region49: #{tpu_custom_call.1} parent=1 // pred_fallthru
      _
    // Predicated region
    $region50: #{tpu_custom_call.1} parent=1 // pred_check
      _
    $region51: #{tpu_custom_call.1} parent=1 // pred_check_branch
      %68 = sbr.rel (0) target = $region53
    $region52: #{tpu_custom_call.1} parent=1 // pred_region
      _
    $region53: #{tpu_custom_call.1} parent=1 // pred_fallthru
      _
    // Predicated region
    $region54: #{tpu_custom_call.1} parent=1 // pred_check
      _
    $region55: #{tpu_custom_call.1} parent=1 // pred_check_branch
      %70 = sbr.rel (0) target = $region57
    $region56: #{tpu_custom_call.1} parent=1 // pred_region
      _
    $region57: #{tpu_custom_call.1} parent=1 // pred_fallthru
      _
    // Predicated region
    $region58: #{tpu_custom_call.1} parent=1 // pred_check
      _
    $region59: #{tpu_custom_call.1} parent=1 // pred_check_branch
      %72 = sbr.rel (0) target = $region61
    $region60: #{tpu_custom_call.1} parent=1 // pred_region
      _
    $region61: #{tpu_custom_call.1} parent=1 // pred_fallthru
      _
    // Predicated region
    $region62: #{tpu_custom_call.1} parent=1 // pred_check
      _
    $region63: #{tpu_custom_call.1} parent=1 // pred_check_branch
      %74 = sbr.rel (0) target = $region65
    $region64: #{tpu_custom_call.1} parent=1 // pred_region
      _
    $region65: #{tpu_custom_call.1} parent=1 // pred_fallthru
      _
    // Predicated region
    $region66: #{tpu_custom_call.1} parent=1 // pred_check
      _
    $region67: #{tpu_custom_call.1} parent=1 // pred_check_branch
      %76 = sbr.rel (0) target = $region69
    $region68: #{tpu_custom_call.1} parent=1 // pred_region
      %77 = dma.done [#allocation3], 128
    $region69: #{tpu_custom_call.1} parent=1 // pred_fallthru
      _
    // Predicated region
    $region70: #{tpu_custom_call.1} parent=1 // pred_check
      _
    $region71: #{tpu_custom_call.1} parent=1 // pred_check_branch
      %79 = sbr.rel (0) target = $region73
    $region72: #{tpu_custom_call.1} parent=1 // pred_region
      %80 = dma.done [#allocation6], 128
    $region73: #{tpu_custom_call.1} parent=1 // pred_fallthru
      _
    %v82 = vld [vmem:[#allocation5] sm:$0xff]
    %v83 = vpack.c.bf16 %v82, %v82
    %v84 = vld [vmem:[%s5] sm:$0xf]
    %v85 = vld [vmem:[%s5 + $0x4] sm:$0xf]
    %v86 = vld [vmem:[%s5 + $0x8] sm:$0xf]
    %v87 = vld [vmem:[%s5 + $0xc] sm:$0xf]
    %v88 = vld [vmem:[%s6] sm:$0x1]
    %v90 = vlaneseq
    %v91 = vshrl.u32 %v90, 7
    %v92 = vsub.s32 0, %v91
    %v93 = vrot.slane %v88, %v92
    %v99 = vunpack.c.l.b16 %v84
    %v100 = vunpack.c.l.b16 %v85
    %v101 = vunpack.c.l.b16 %v86
    %v102 = vunpack.c.l.b16 %v87
    %v103 = vpack.c.b16 %v100, %v99
    %v104 = vpack.c.b16 %v102, %v101
    %vm107 = vcmask 261120
    %v109 = vsel %vm107, %v83, 0
    %111 = vmatprep.subr.bf16.mxu0 0
    %112 = vmatpush1.bf16.msra.mxu0 %v103
    %113 = vmatprep.subr.bf16.mxu0 0
    %114 = vmatpush1.bf16.msra.mxu0 %v104
    %115 = vmatprep.subr.bf16.mxu0 0
    %116 = vmatpush1.bf16.msra.mxu0 0
    %117 = vmatprep.subr.bf16.mxu0 0
    %118 = vmatpush1.bf16.msra.mxu0 0
    %119 = vmatprep.subr.bf16.mxu0 0
    %120 = vmatpush1.bf16.msra.mxu0 0
    %121 = vmatprep.subr.bf16.mxu0 0
    %122 = vmatpush1.bf16.msra.mxu0 0
    %123 = vmatprep.subr.bf16.mxu0 0
    %124 = vmatpush1.bf16.msra.mxu0 0
    %125 = vmatprep.subr.bf16.mxu0 0
    %126 = vmatpush1.bf16.msra.mxu0 0
    %127 = vmatprep.subr.bf16.mxu0 0
    %128 = vmatpush1.bf16.msra.mxu0 0
    %129 = vmatprep.subr.bf16.mxu0 0
    %130 = vmatpush1.bf16.msra.mxu0 0
    %131 = vmatprep.subr.bf16.mxu0 0
    %132 = vmatpush1.bf16.msra.mxu0 0
    %133 = vmatprep.subr.bf16.mxu0 0
    %134 = vmatpush1.bf16.msra.mxu0 0
    %135 = vmatprep.subr.bf16.mxu0 0
    %136 = vmatpush1.bf16.msra.mxu0 0
    %137 = vmatprep.subr.bf16.mxu0 0
    %138 = vmatpush1.bf16.msra.mxu0 0
    %139 = vmatprep.subr.bf16.mxu0 0
    %140 = vmatpush1.bf16.msra.mxu0 0
    %141 = vmatprep.subr.bf16.mxu0 0
    %142 = vmatpush1.bf16.msra.mxu0 0
    %143 = vmatprep.mubr.bf16.mxu0 0
    %144 = vmatmul.mubr.bf16.gmra.mrb[0].mxu0 %v109
    %v145 = vpop.f32.mrb[0].mxu0
    %v146 = vadd.f32 %v93, %v145
    %v147 = vpop.f32.mrb[0].mxu0
    %v148 = vpop.f32.mrb[0].mxu0
    %v149 = vpop.f32.mrb[0].mxu0
    %150 = vdwg.mxu0
    %v151 = vmax.f32 %v146, 0.0
    %v152 = vpack.c.bf16 %v151, %v151
    %v153 = vld [vmem:[%s7] sm:$0xf]
    %v154 = vld [vmem:[%s7 + $0x4] sm:$0xf]
    %v155 = vld [vmem:[%s7 + $0x8] sm:$0xf]
    %v156 = vld [vmem:[%s7 + $0xc] sm:$0xf]
    %v157 = vld [vmem:[%s8] sm:$0x1]
    %v159 = vlaneseq
    %v160 = vshrl.u32 %v159, 7
    %v161 = vsub.s32 0, %v160
    %v162 = vrot.slane %v157, %v161
    %v168 = vunpack.c.l.b16 %v153
    %v169 = vunpack.c.l.b16 %v154
    %v170 = vunpack.c.l.b16 %v155
    %v171 = vunpack.c.l.b16 %v156
    %v172 = vpack.c.b16 %v169, %v168
    %v173 = vpack.c.b16 %v171, %v170
    %v177 = vsel %vm107, %v152, 0
    %179 = vmatprep.subr.bf16.mxu0 0
    %180 = vmatpush1.bf16.msra.mxu0 %v172
    %181 = vmatprep.subr.bf16.mxu0 0
    %182 = vmatpush1.bf16.msra.mxu0 %v173
    %183 = vmatprep.subr.bf16.mxu0 0
    %184 = vmatpush1.bf16.msra.mxu0 0
    %185 = vmatprep.subr.bf16.mxu0 0
    %186 = vmatpush1.bf16.msra.mxu0 0
    %187 = vmatprep.subr.bf16.mxu0 0
    %188 = vmatpush1.bf16.msra.mxu0 0
    %189 = vmatprep.subr.bf16.mxu0 0
    %190 = vmatpush1.bf16.msra.mxu0 0
    %191 = vmatprep.subr.bf16.mxu0 0
    %192 = vmatpush1.bf16.msra.mxu0 0
    %193 = vmatprep.subr.bf16.mxu0 0
    %194 = vmatpush1.bf16.msra.mxu0 0
    %195 = vmatprep.subr.bf16.mxu0 0
    %196 = vmatpush1.bf16.msra.mxu0 0
    %197 = vmatprep.subr.bf16.mxu0 0
    %198 = vmatpush1.bf16.msra.mxu0 0
    %199 = vmatprep.subr.bf16.mxu0 0
    %200 = vmatpush1.bf16.msra.mxu0 0
    %201 = vmatprep.subr.bf16.mxu0 0
    %202 = vmatpush1.bf16.msra.mxu0 0
    %203 = vmatprep.subr.bf16.mxu0 0
    %204 = vmatpush1.bf16.msra.mxu0 0
    %205 = vmatprep.subr.bf16.mxu0 0
    %206 = vmatpush1.bf16.msra.mxu0 0
    %207 = vmatprep.subr.bf16.mxu0 0
    %208 = vmatpush1.bf16.msra.mxu0 0
    %209 = vmatprep.subr.bf16.mxu0 0
    %210 = vmatpush1.bf16.msra.mxu0 0
    %211 = vmatprep.mubr.bf16.mxu0 0
    %212 = vmatmul.mubr.bf16.gmra.mrb[0].mxu0 %v177
    %v213 = vpop.f32.mrb[0].mxu0
    %v214 = vadd.f32 %v162, %v213
    %v215 = vpop.f32.mrb[0].mxu0
    %v216 = vpop.f32.mrb[0].mxu0
    %v217 = vpop.f32.mrb[0].mxu0
    %218 = vdwg.mxu0
    %v219 = vld [vmem:[#allocation2] sm:$0xff]
    %v220 = vpack.c.bf16 %v219, %v219
    %v221 = vld [vmem:[%s9] sm:$0xf]
    %v222 = vld [vmem:[%s9 + $0x4] sm:$0xf]
    %v223 = vld [vmem:[%s9 + $0x8] sm:$0xf]
    %v224 = vld [vmem:[%s9 + $0xc] sm:$0xf]
    %v225 = vld [vmem:[%s10] sm:$0x1]
    %v227 = vlaneseq
    %v228 = vshrl.u32 %v227, 7
    %v229 = vsub.s32 0, %v228
    %v230 = vrot.slane %v225, %v229
    %v236 = vunpack.c.l.b16 %v221
    %v237 = vunpack.c.l.b16 %v222
    %v238 = vunpack.c.l.b16 %v223
    %v239 = vunpack.c.l.b16 %v224
    %v240 = vpack.c.b16 %v237, %v236
    %v241 = vpack.c.b16 %v239, %v238
    %v245 = vsel %vm107, %v220, 0
    %247 = vmatprep.subr.bf16.mxu0 0
    %248 = vmatpush1.bf16.msra.mxu0 %v240
    %249 = vmatprep.subr.bf16.mxu0 0
    %250 = vmatpush1.bf16.msra.mxu0 %v241
    %251 = vmatprep.subr.bf16.mxu0 0
    %252 = vmatpush1.bf16.msra.mxu0 0
    %253 = vmatprep.subr.bf16.mxu0 0
    %254 = vmatpush1.bf16.msra.mxu0 0
    %255 = vmatprep.subr.bf16.mxu0 0
    %256 = vmatpush1.bf16.msra.mxu0 0
    %257 = vmatprep.subr.bf16.mxu0 0
    %258 = vmatpush1.bf16.msra.mxu0 0
    %259 = vmatprep.subr.bf16.mxu0 0
    %260 = vmatpush1.bf16.msra.mxu0 0
    %261 = vmatprep.subr.bf16.mxu0 0
    %262 = vmatpush1.bf16.msra.mxu0 0
    %263 = vmatprep.subr.bf16.mxu0 0
    %264 = vmatpush1.bf16.msra.mxu0 0
    %265 = vmatprep.subr.bf16.mxu0 0
    %266 = vmatpush1.bf16.msra.mxu0 0
    %267 = vmatprep.subr.bf16.mxu0 0
    %268 = vmatpush1.bf16.msra.mxu0 0
    %269 = vmatprep.subr.bf16.mxu0 0
    %270 = vmatpush1.bf16.msra.mxu0 0
    %271 = vmatprep.subr.bf16.mxu0 0
    %272 = vmatpush1.bf16.msra.mxu0 0
    %273 = vmatprep.subr.bf16.mxu0 0
    %274 = vmatpush1.bf16.msra.mxu0 0
    %275 = vmatprep.subr.bf16.mxu0 0
    %276 = vmatpush1.bf16.msra.mxu0 0
    %277 = vmatprep.subr.bf16.mxu0 0
    %278 = vmatpush1.bf16.msra.mxu0 0
    %279 = vmatprep.mubr.bf16.mxu0 0
    %280 = vmatmul.mubr.bf16.gmra.mrb[0].mxu0 %v245
    %v281 = vpop.f32.mrb[0].mxu0
    %v282 = vadd.f32 %v230, %v281
    %v283 = vpop.f32.mrb[0].mxu0
    %v284 = vpop.f32.mrb[0].mxu0
    %v285 = vpop.f32.mrb[0].mxu0
    %286 = vdwg.mxu0
    %v287 = vtanh.pop %v282
    %v288 = vpack.c.bf16 %v287, %v287
    %v289 = vld [vmem:[%s11] sm:$0xf]
    %v290 = vld [vmem:[%s11 + $0x4] sm:$0xf]
    %v291 = vld [vmem:[%s11 + $0x8] sm:$0xf]
    %v292 = vld [vmem:[%s11 + $0xc] sm:$0xf]
    %v293 = vld [vmem:[%s12] sm:$0x1]
    %v295 = vlaneseq
    %v296 = vshrl.u32 %v295, 7
    %v297 = vsub.s32 0, %v296
    %v298 = vrot.slane %v293, %v297
    %v304 = vunpack.c.l.b16 %v289
    %v305 = vunpack.c.l.b16 %v290
    %v306 = vunpack.c.l.b16 %v291
    %v307 = vunpack.c.l.b16 %v292
    %v308 = vpack.c.b16 %v305, %v304
    %v309 = vpack.c.b16 %v307, %v306
    %v313 = vsel %vm107, %v288, 0
    %315 = vmatprep.subr.bf16.mxu0 0
    %316 = vmatpush1.bf16.msra.mxu0 %v308
    %317 = vmatprep.subr.bf16.mxu0 0
    %318 = vmatpush1.bf16.msra.mxu0 %v309
    %319 = vmatprep.subr.bf16.mxu0 0
    %320 = vmatpush1.bf16.msra.mxu0 0
    %321 = vmatprep.subr.bf16.mxu0 0
    %322 = vmatpush1.bf16.msra.mxu0 0
    %323 = vmatprep.subr.bf16.mxu0 0
    %324 = vmatpush1.bf16.msra.mxu0 0
    %325 = vmatprep.subr.bf16.mxu0 0
    %326 = vmatpush1.bf16.msra.mxu0 0
    %327 = vmatprep.subr.bf16.mxu0 0
    %328 = vmatpush1.bf16.msra.mxu0 0
    %329 = vmatprep.subr.bf16.mxu0 0
    %330 = vmatpush1.bf16.msra.mxu0 0
    %331 = vmatprep.subr.bf16.mxu0 0
    %332 = vmatpush1.bf16.msra.mxu0 0
    %333 = vmatprep.subr.bf16.mxu0 0
    %334 = vmatpush1.bf16.msra.mxu0 0
    %335 = vmatprep.subr.bf16.mxu0 0
    %336 = vmatpush1.bf16.msra.mxu0 0
    %337 = vmatprep.subr.bf16.mxu0 0
    %338 = vmatpush1.bf16.msra.mxu0 0
    %339 = vmatprep.subr.bf16.mxu0 0
    %340 = vmatpush1.bf16.msra.mxu0 0
    %341 = vmatprep.subr.bf16.mxu0 0
    %342 = vmatpush1.bf16.msra.mxu0 0
    %343 = vmatprep.subr.bf16.mxu0 0
    %344 = vmatpush1.bf16.msra.mxu0 0
    %345 = vmatprep.subr.bf16.mxu0 0
    %346 = vmatpush1.bf16.msra.mxu0 0
    %347 = vmatprep.mubr.bf16.mxu0 0
    %348 = vmatmul.mubr.bf16.gmra.mrb[0].mxu0 %v313
    %v349 = vpop.f32.mrb[0].mxu0
    %v350 = vadd.f32 %v298, %v349
    %v351 = vpop.f32.mrb[0].mxu0
    %v352 = vpop.f32.mrb[0].mxu0
    %v353 = vpop.f32.mrb[0].mxu0
    %354 = vdwg.mxu0
    %v355 = vld [vmem:[%s13] sm:$0x1]
    %v357 = vcombine.high %v350, %v350
    %v359 = vunpack.c.l.s4 1966171168
    %v360 = vunpack.c.0.s8 %v359
    %v361 = vlaneseq
    %v362 = vshrl.u32 %v361, 7
    %v363 = vsub.s32 %v360, %v362
    %v364 = vrot.slane %v350, %v363
    %v366 = vunpack.c.l.s4 1966171168
    %v367 = vunpack.c.0.s8 %v366
    %v368 = vlaneseq
    %v369 = vshrl.u32 %v368, 7
    %v370 = vsub.s32 %v367, %v369
    %v371 = vrot.slane %v357, %v370
    %v372 = vcombine.high %v364, %v364
    %v373 = vcombine.high %v371, %v371
    %v375 = vunpack.c.l.s4 1966171168
    %v376 = vunpack.c.0.s8 %v375
    %v377 = vlaneseq
    %v378 = vshrl.u32 %v377, 7
    %v379 = vsub.s32 %v376, %v378
    %v380 = vrot.slane %v364, %v379
    %v382 = vunpack.c.l.s4 1966171168
    %v383 = vunpack.c.0.s8 %v382
    %v384 = vlaneseq
    %v385 = vshrl.u32 %v384, 7
    %v386 = vsub.s32 %v383, %v385
    %v387 = vrot.slane %v371, %v386
    %v389 = vunpack.c.l.s4 1966171168
    %v390 = vunpack.c.0.s8 %v389
    %v391 = vlaneseq
    %v392 = vshrl.u32 %v391, 7
    %v393 = vsub.s32 %v390, %v392
    %v394 = vrot.slane %v372, %v393
    %v396 = vunpack.c.l.s4 1966171168
    %v397 = vunpack.c.0.s8 %v396
    %v398 = vlaneseq
    %v399 = vshrl.u32 %v398, 7
    %v400 = vsub.s32 %v397, %v399
    %v401 = vrot.slane %v373, %v400
    %v402 = vcombine.high %v380, %v380
    %v403 = vcombine.high %v387, %v387
    %v404 = vcombine.high %v394, %v394
    %v405 = vcombine.high %v401, %v401
    %v406 = vld [vmem:[%s0] sm:$0xf]
    %v407 = vld [vmem:[%s0 + $0x4] sm:$0xf]
    %v408 = vld [vmem:[%s0 + $0x8] sm:$0xf]
    %v409 = vld [vmem:[%s0 + $0xc] sm:$0xf]
    %v410 = vld [vmem:[%s0 + $0x10] sm:$0xf]
    %v411 = vld [vmem:[%s0 + $0x14] sm:$0xf]
    %v412 = vld [vmem:[%s0 + $0x18] sm:$0xf]
    %v413 = vld [vmem:[%s0 + $0x1c] sm:$0xf]
    %v414 = vld [vmem:[%s3] sm:$0xf]
    %v415 = vld [vmem:[%s3 + $0x4] sm:$0xf]
    %v416 = vld [vmem:[%s3 + $0x8] sm:$0xf]
    %v417 = vld [vmem:[%s3 + $0xc] sm:$0xf]
    %v418 = vld [vmem:[%s4] sm:$0x1]
    %v420 = vlaneseq
    %v421 = vshrl.u32 %v420, 7
    %v422 = vsub.s32 0, %v421
    %v423 = vrot.slane %v418, %v422
    %v433 = vunpack.c.l.b16 %v406
    %v434 = vunpack.c.l.b16 %v407
    %v435 = vunpack.c.l.b16 %v408
    %v436 = vunpack.c.l.b16 %v409
    %v437 = vunpack.c.l.b16 %v410
    %v438 = vunpack.c.l.b16 %v411
    %v439 = vunpack.c.l.b16 %v412
    %v440 = vunpack.c.l.b16 %v413
    %v441 = vpack.c.b16 %v434, %v433
    %v442 = vpack.c.b16 %v436, %v435
    %v443 = vpack.c.b16 %v438, %v437
    %v444 = vpack.c.b16 %v440, %v439
    %v449 = vunpack.c.l.b16 %v414
    %v450 = vunpack.c.l.b16 %v415
    %v451 = vunpack.c.l.b16 %v416
    %v452 = vunpack.c.l.b16 %v417
    %v453 = vpack.c.b16 %v450, %v449
    %v454 = vpack.c.b16 %v452, %v451
    %v458 = vsel %vm107, %v441, 0
    %v461 = vsel %vm107, %v442, 0
    %v464 = vsel %vm107, %v443, 0
    %v467 = vsel %vm107, %v444, 0
    %469 = vmatprep.subr.bf16.mxu0 0
    %470 = vmatpush1.bf16.msra.mxu0 %v453
    %471 = vmatprep.subr.bf16.mxu0 0
    %472 = vmatpush1.bf16.msra.mxu0 %v454
    %473 = vmatprep.subr.bf16.mxu0 0
    %474 = vmatpush1.bf16.msra.mxu0 0
    %475 = vmatprep.subr.bf16.mxu0 0
    %476 = vmatpush1.bf16.msra.mxu0 0
    %477 = vmatprep.subr.bf16.mxu0 0
    %478 = vmatpush1.bf16.msra.mxu0 0
    %479 = vmatprep.subr.bf16.mxu0 0
    %480 = vmatpush1.bf16.msra.mxu0 0
    %481 = vmatprep.subr.bf16.mxu0 0
    %482 = vmatpush1.bf16.msra.mxu0 0
    %483 = vmatprep.subr.bf16.mxu0 0
    %484 = vmatpush1.bf16.msra.mxu0 0
    %485 = vmatprep.subr.bf16.mxu0 0
    %486 = vmatpush1.bf16.msra.mxu0 0
    %487 = vmatprep.subr.bf16.mxu0 0
    %488 = vmatpush1.bf16.msra.mxu0 0
    %489 = vmatprep.subr.bf16.mxu0 0
    %490 = vmatpush1.bf16.msra.mxu0 0
    %491 = vmatprep.subr.bf16.mxu0 0
    %492 = vmatpush1.bf16.msra.mxu0 0
    %493 = vmatprep.subr.bf16.mxu0 0
    %494 = vmatpush1.bf16.msra.mxu0 0
    %495 = vmatprep.subr.bf16.mxu0 0
    %496 = vmatpush1.bf16.msra.mxu0 0
    %497 = vmatprep.subr.bf16.mxu0 0
    %498 = vmatpush1.bf16.msra.mxu0 0
    %499 = vmatprep.subr.bf16.mxu0 0
    %500 = vmatpush1.bf16.msra.mxu0 0
    %501 = vmatprep.mubr.bf16.mxu0 0
    %502 = vmatmul.mubr.bf16.gmra.mrb[0].mxu0 %v458
    %v503 = vpop.f32.mrb[0].mxu0
    %v504 = vadd.f32 %v423, %v503
    %v505 = vpop.f32.mrb[0].mxu0
    %v506 = vpop.f32.mrb[0].mxu0
    %v507 = vadd.f32 %v423, %v506
    %v508 = vpop.f32.mrb[0].mxu0
    %509 = vmatprep.mubr.bf16.mxu0 0
    %510 = vmatmul.mubr.bf16.gmra.mrb[0].mxu0 %v461
    %v511 = vpop.f32.mrb[0].mxu0
    %v512 = vadd.f32 %v423, %v511
    %v513 = vpop.f32.mrb[0].mxu0
    %v514 = vpop.f32.mrb[0].mxu0
    %v515 = vadd.f32 %v423, %v514
    %v516 = vpop.f32.mrb[0].mxu0
    %517 = vmatprep.mubr.bf16.mxu0 0
    %518 = vmatmul.mubr.bf16.gmra.mrb[0].mxu0 %v464
    %v519 = vpop.f32.mrb[0].mxu0
    %v520 = vadd.f32 %v423, %v519
    %v521 = vpop.f32.mrb[0].mxu0
    %v522 = vpop.f32.mrb[0].mxu0
    %v523 = vadd.f32 %v423, %v522
    %v524 = vpop.f32.mrb[0].mxu0
    %525 = vmatprep.mubr.bf16.mxu0 0
    %526 = vmatmul.mubr.bf16.gmra.mrb[0].mxu0 %v467
    %v527 = vpop.f32.mrb[0].mxu0
    %v528 = vadd.f32 %v423, %v527
    %v529 = vpop.f32.mrb[0].mxu0
    %v530 = vpop.f32.mrb[0].mxu0
    %v531 = vadd.f32 %v423, %v530
    %v532 = vpop.f32.mrb[0].mxu0
    %533 = vdwg.mxu0
    %v534 = vlaneseq
    %v535 = vshrl.u32 %v534, 7
    %v536 = vsub.s32 0, %v535
    %v537 = vrot.slane %v380, %v536
    %v538 = vlaneseq
    %v539 = vshrl.u32 %v538, 7
    %v540 = vsub.s32 0, %v539
    %v541 = vrot.slane %v394, %v540
    %v542 = vlaneseq
    %v543 = vshrl.u32 %v542, 7
    %v544 = vsub.s32 0, %v543
    %v545 = vrot.slane %v402, %v544
    %v546 = vlaneseq
    %v547 = vshrl.u32 %v546, 7
    %v548 = vsub.s32 0, %v547
    %v549 = vrot.slane %v404, %v548
    %v550 = vlaneseq
    %v551 = vshrl.u32 %v550, 7
    %v552 = vsub.s32 0, %v551
    %v553 = vrot.slane %v387, %v552
    %v554 = vlaneseq
    %v555 = vshrl.u32 %v554, 7
    %v556 = vsub.s32 0, %v555
    %v557 = vrot.slane %v401, %v556
    %v558 = vlaneseq
    %v559 = vshrl.u32 %v558, 7
    %v560 = vsub.s32 0, %v559
    %v561 = vrot.slane %v403, %v560
    %v562 = vlaneseq
    %v563 = vshrl.u32 %v562, 7
    %v564 = vsub.s32 0, %v563
    %v565 = vrot.slane %v405, %v564
    %v574 = vadd.f32 %v504, %v537
    %v575 = vadd.f32 %v507, %v541
    %v576 = vadd.f32 %v512, %v545
    %v577 = vadd.f32 %v515, %v549
    %v578 = vadd.f32 %v520, %v553
    %v579 = vadd.f32 %v523, %v557
    %v580 = vadd.f32 %v528, %v561
    %v581 = vadd.f32 %v531, %v565
    %v582 = vtanh.pop %v574
    %v583 = vtanh.pop %v575
    %v584 = vtanh.pop %v576
    %v585 = vtanh.pop %v577
    %v586 = vtanh.pop %v578
    %v587 = vtanh.pop %v579
    %v588 = vtanh.pop %v580
    %v589 = vtanh.pop %v581
    %v591 = vlaneseq
    %v592 = vshrl.u32 %v591, 7
    %v593 = vsub.s32 0, %v592
    %v594 = vrot.slane %v355, %v593
    %v596 = vmul.f32 %v582, %v594
    %v597 = vmul.f32 %v583, %v594
    %v598 = vmul.f32 %v584, %v594
    %v599 = vmul.f32 %v585, %v594
    %v600 = vmul.f32 %v586, %v594
    %v601 = vmul.f32 %v587, %v594
    %v602 = vmul.f32 %v588, %v594
    %v603 = vmul.f32 %v589, %v594
    %vm604 = vcmask 130048
    %v605 = vsel %vm604, %v596, 0.0
    %606 = vadd.xlane.f32.xlu0 %v605
    %v607 = vpop.xlane.xlu0 %606
    %v608 = vsel %vm604, %v597, 0.0
    %609 = vadd.xlane.f32.xlu0 %v608
    %v610 = vpop.xlane.xlu0 %609
    %v611 = vsel %vm604, %v598, 0.0
    %612 = vadd.xlane.f32.xlu0 %v611
    %v613 = vpop.xlane.xlu0 %612
    %v614 = vsel %vm604, %v599, 0.0
    %615 = vadd.xlane.f32.xlu0 %v614
    %v616 = vpop.xlane.xlu0 %615
    %v617 = vsel %vm604, %v600, 0.0
    %618 = vadd.xlane.f32.xlu0 %v617
    %v619 = vpop.xlane.xlu0 %618
    %v620 = vsel %vm604, %v601, 0.0
    %621 = vadd.xlane.f32.xlu0 %v620
    %v622 = vpop.xlane.xlu0 %621
    %v623 = vsel %vm604, %v602, 0.0
    %624 = vadd.xlane.f32.xlu0 %v623
    %v625 = vpop.xlane.xlu0 %624
    %v626 = vsel %vm604, %v603, 0.0
    %627 = vadd.xlane.f32.xlu0 %v626
    %v628 = vpop.xlane.xlu0 %627
    %v629 = vadd.f32 %v214, %v350
    %v630 = vtanh.pop %v629
    %v631 = vmul.f32 %v630, %v594
    %v632 = vsel %vm604, %v631, 0.0
    %633 = vadd.xlane.f32.xlu0 %v632
    %v634 = vpop.xlane.xlu0 %633
    %v643 = vlaneseq
    %v644 = vand.u32 %v643, 127
    %v645 = vlaneseq
    %v646 = vshrl.u32 %v645, 7
    %v647 = vsub.s32 %v644, %v646
    %v648 = vrot.slane %v607, %v647
    %v649 = vlaneseq
    %v650 = vshrl.u32 %v649, 7
    %v651 = vsub.s32 %v644, %v650
    %v652 = vrot.slane %v610, %v651
    %v653 = vlaneseq
    %v654 = vshrl.u32 %v653, 7
    %v655 = vsub.s32 %v644, %v654
    %v656 = vrot.slane %v613, %v655
    %v657 = vlaneseq
    %v658 = vshrl.u32 %v657, 7
    %v659 = vsub.s32 %v644, %v658
    %v660 = vrot.slane %v616, %v659
    %v661 = vlaneseq
    %v662 = vshrl.u32 %v661, 7
    %v663 = vsub.s32 %v644, %v662
    %v664 = vrot.slane %v619, %v663
    %v665 = vlaneseq
    %v666 = vshrl.u32 %v665, 7
    %v667 = vsub.s32 %v644, %v666
    %v668 = vrot.slane %v622, %v667
    %v669 = vlaneseq
    %v670 = vshrl.u32 %v669, 7
    %v671 = vsub.s32 %v644, %v670
    %v672 = vrot.slane %v625, %v671
    %v673 = vlaneseq
    %v674 = vshrl.u32 %v673, 7
    %v675 = vsub.s32 %v644, %v674
    %v676 = vrot.slane %v628, %v675
    %vm677 = vcmask 1041409
    %v678 = vsel %vm677, %v652, %v648
    %vm679 = vcmask 1042434
    %v680 = vsel %vm679, %v656, %v678
    %vm681 = vcmask 1043459
    %v682 = vsel %vm681, %v660, %v680
    %vm683 = vcmask 1044484
    %v684 = vsel %vm683, %v664, %v682
    %vm685 = vcmask 1045509
    %v686 = vsel %vm685, %v668, %v684
    %vm687 = vcmask 1046534
    %v688 = vsel %vm687, %v672, %v686
    %vm689 = vcmask 1047559
    %v690 = vsel %vm689, %v676, %v688
    %vm692 = vcmask 64512
    %v693 = vsel %vm692, %v690, -1e+30
    %vm694 = vcmp.lt.s32.totalorder %v644, 8
    %vm695 = vcmp.eq.s32.totalorder %v644, 8
    %v696 = vsel %vm695, %v634, -1e+30
    %v697 = vsel %vm694, %v693, %v696
    %698 = vmax.xlane.f32.xlu0 %v697
    %v699 = vpop.xlane.xlu0 %698
    %v700 = vsub.f32 %v697, %v699
    %v701 = vmul.f32 %v700, 1.442695
    %v702 = vpow.pop %v701
    %703 = vadd.xlane.f32.xlu0 %v702
    %v704 = vpop.xlane.xlu0 %703
    %v705 = vrcp.pop %v704
    %v706 = vmul.f32 1.0, %v705
    %v707 = vmul.f32 %v702, %v706
    %708 = vst [vmem:[#allocation8] sm:$0xff] %v707
    %710 = vset.pattern.permute.xlu0 8
    %711 = vperm.xlu0 %710, %v707
    %v712 = vpop.permute.xlu0 %711
    %v714 = vmul.f32 %v712, %v151
    %v715 = vld [vmem:[%s0] sm:$0xf]
    %v716 = vld [vmem:[%s0 + $0x4] sm:$0xf]
    %v717 = vld [vmem:[%s0 + $0x8] sm:$0xf]
    %v718 = vld [vmem:[%s0 + $0xc] sm:$0xf]
    %v719 = vld [vmem:[%s0 + $0x10] sm:$0xf]
    %v720 = vld [vmem:[%s0 + $0x14] sm:$0xf]
    %v721 = vld [vmem:[%s0 + $0x18] sm:$0xf]
    %v722 = vld [vmem:[%s0 + $0x1c] sm:$0xf]
    %v723 = vunpack.c.l.bf16 %v715
    %v724 = vunpack.c.l.bf16 %v716
    %v725 = vunpack.c.l.bf16 %v717
    %v726 = vunpack.c.l.bf16 %v718
    %v727 = vunpack.c.l.bf16 %v719
    %v728 = vunpack.c.l.bf16 %v720
    %v729 = vunpack.c.l.bf16 %v721
    %v730 = vunpack.c.l.bf16 %v722
    %v731 = vlaneseq
    %v732 = vshrl.u32 %v731, 7
    %v733 = vsub.s32 0, %v732
    %v734 = vrot.slane %v707, %v733
    %736 = vbcast.lane.b32.xlu0 %v734, 256
    %v737 = vpop.permute.xlu0 %736
    %v738 = vlaneseq
    %v739 = vshrl.u32 %v738, 7
    %v740 = vsub.s32 1, %v739
    %v741 = vrot.slane %v707, %v740
    %743 = vbcast.lane.b32.xlu0 %v741, 256
    %v744 = vpop.permute.xlu0 %743
    %v745 = vlaneseq
    %v746 = vshrl.u32 %v745, 7
    %v747 = vsub.s32 2, %v746
    %v748 = vrot.slane %v707, %v747
    %750 = vbcast.lane.b32.xlu0 %v748, 256
    %v751 = vpop.permute.xlu0 %750
    %v752 = vlaneseq
    %v753 = vshrl.u32 %v752, 7
    %v754 = vsub.s32 3, %v753
    %v755 = vrot.slane %v707, %v754
    %757 = vbcast.lane.b32.xlu0 %v755, 256
    %v758 = vpop.permute.xlu0 %757
    %v759 = vlaneseq
    %v760 = vshrl.u32 %v759, 7
    %v761 = vsub.s32 4, %v760
    %v762 = vrot.slane %v707, %v761
    %764 = vbcast.lane.b32.xlu0 %v762, 256
    %v765 = vpop.permute.xlu0 %764
    %v766 = vlaneseq
    %v767 = vshrl.u32 %v766, 7
    %v768 = vsub.s32 5, %v767
    %v769 = vrot.slane %v707, %v768
    %771 = vbcast.lane.b32.xlu0 %v769, 256
    %v772 = vpop.permute.xlu0 %771
    %v773 = vlaneseq
    %v774 = vshrl.u32 %v773, 7
    %v775 = vsub.s32 6, %v774
    %v776 = vrot.slane %v707, %v775
    %778 = vbcast.lane.b32.xlu0 %v776, 256
    %v779 = vpop.permute.xlu0 %778
    %v780 = vlaneseq
    %v781 = vshrl.u32 %v780, 7
    %v782 = vsub.s32 7, %v781
    %v783 = vrot.slane %v707, %v782
    %785 = vbcast.lane.b32.xlu0 %v783, 256
    %v786 = vpop.permute.xlu0 %785
    %v787 = vmul.f32 %v723, %v737
    %v788 = vmul.f32 %v724, %v744
    %v789 = vmul.f32 %v725, %v751
    %v790 = vmul.f32 %v726, %v758
    %v791 = vmul.f32 %v727, %v765
    %v792 = vmul.f32 %v728, %v772
    %v793 = vmul.f32 %v729, %v779
    %v794 = vmul.f32 %v730, %v786
    %v795 = vsel %vm107, %v787, 0.0
    %v796 = vrot.slane %v795, 4
    %v797 = vadd.f32 %v795, %v796
    %v798 = vrot.slane %v797, 2
    %v799 = vadd.f32 %v797, %v798
    %v800 = vrot.slane %v799, 1
    %v801 = vadd.f32 %v799, %v800
    %v802 = vsel %vm107, %v788, 0.0
    %v803 = vrot.slane %v802, 4
    %v804 = vadd.f32 %v802, %v803
    %v805 = vrot.slane %v804, 2
    %v806 = vadd.f32 %v804, %v805
    %v807 = vrot.slane %v806, 1
    %v808 = vadd.f32 %v806, %v807
    %v809 = vsel %vm107, %v789, 0.0
    %v810 = vrot.slane %v809, 4
    %v811 = vadd.f32 %v809, %v810
    %v812 = vrot.slane %v811, 2
    %v813 = vadd.f32 %v811, %v812
    %v814 = vrot.slane %v813, 1
    %v815 = vadd.f32 %v813, %v814
    %v816 = vsel %vm107, %v790, 0.0
    %v817 = vrot.slane %v816, 4
    %v818 = vadd.f32 %v816, %v817
    %v819 = vrot.slane %v818, 2
    %v820 = vadd.f32 %v818, %v819
    %v821 = vrot.slane %v820, 1
    %v822 = vadd.f32 %v820, %v821
    %v823 = vsel %vm107, %v791, 0.0
    %v824 = vrot.slane %v823, 4
    %v825 = vadd.f32 %v823, %v824
    %v826 = vrot.slane %v825, 2
    %v827 = vadd.f32 %v825, %v826
    %v828 = vrot.slane %v827, 1
    %v829 = vadd.f32 %v827, %v828
    %v830 = vsel %vm107, %v792, 0.0
    %v831 = vrot.slane %v830, 4
    %v832 = vadd.f32 %v830, %v831
    %v833 = vrot.slane %v832, 2
    %v834 = vadd.f32 %v832, %v833
    %v835 = vrot.slane %v834, 1
    %v836 = vadd.f32 %v834, %v835
    %v837 = vsel %vm107, %v793, 0.0
    %v838 = vrot.slane %v837, 4
    %v839 = vadd.f32 %v837, %v838
    %v840 = vrot.slane %v839, 2
    %v841 = vadd.f32 %v839, %v840
    %v842 = vrot.slane %v841, 1
    %v843 = vadd.f32 %v841, %v842
    %v844 = vsel %vm107, %v794, 0.0
    %v845 = vrot.slane %v844, 4
    %v846 = vadd.f32 %v844, %v845
    %v847 = vrot.slane %v846, 2
    %v848 = vadd.f32 %v846, %v847
    %v849 = vrot.slane %v848, 1
    %v850 = vadd.f32 %v848, %v849
    %v859 = vsel %vm677, %v808, %v801
    %v860 = vsel %vm679, %v815, %v859
    %v861 = vsel %vm681, %v822, %v860
    %v862 = vsel %vm683, %v829, %v861
    %v863 = vsel %vm685, %v836, %v862
    %v864 = vsel %vm687, %v843, %v863
    %v865 = vsel %vm689, %v850, %v864
    %v867 = vadd.f32 %v714, %v865
    %v868 = vadd.f32 %v867, %v287
    %v869 = vpack.c.bf16 %v868, %v868
    %v870 = vld [vmem:[%s14] sm:$0xf]
    %v871 = vld [vmem:[%s14 + $0x4] sm:$0xf]
    %v872 = vld [vmem:[%s14 + $0x8] sm:$0xf]
    %v873 = vld [vmem:[%s14 + $0xc] sm:$0xf]
    %v874 = vld [vmem:[%s15] sm:$0x1]
    %v876 = vlaneseq
    %v877 = vshrl.u32 %v876, 7
    %v878 = vsub.s32 0, %v877
    %v879 = vrot.slane %v874, %v878
    %v885 = vunpack.c.l.b16 %v870
    %v886 = vunpack.c.l.b16 %v871
    %v887 = vunpack.c.l.b16 %v872
    %v888 = vunpack.c.l.b16 %v873
    %v889 = vpack.c.b16 %v886, %v885
    %v890 = vpack.c.b16 %v888, %v887
    %v894 = vsel %vm107, %v869, 0
    %896 = vmatprep.subr.bf16.mxu0 0
    %897 = vmatpush1.bf16.msra.mxu0 %v889
    %898 = vmatprep.subr.bf16.mxu0 0
    %899 = vmatpush1.bf16.msra.mxu0 %v890
    %900 = vmatprep.subr.bf16.mxu0 0
    %901 = vmatpush1.bf16.msra.mxu0 0
    %902 = vmatprep.subr.bf16.mxu0 0
    %903 = vmatpush1.bf16.msra.mxu0 0
    %904 = vmatprep.subr.bf16.mxu0 0
    %905 = vmatpush1.bf16.msra.mxu0 0
    %906 = vmatprep.subr.bf16.mxu0 0
    %907 = vmatpush1.bf16.msra.mxu0 0
    %908 = vmatprep.subr.bf16.mxu0 0
    %909 = vmatpush1.bf16.msra.mxu0 0
    %910 = vmatprep.subr.bf16.mxu0 0
    %911 = vmatpush1.bf16.msra.mxu0 0
    %912 = vmatprep.subr.bf16.mxu0 0
    %913 = vmatpush1.bf16.msra.mxu0 0
    %914 = vmatprep.subr.bf16.mxu0 0
    %915 = vmatpush1.bf16.msra.mxu0 0
    %916 = vmatprep.subr.bf16.mxu0 0
    %917 = vmatpush1.bf16.msra.mxu0 0
    %918 = vmatprep.subr.bf16.mxu0 0
    %919 = vmatpush1.bf16.msra.mxu0 0
    %920 = vmatprep.subr.bf16.mxu0 0
    %921 = vmatpush1.bf16.msra.mxu0 0
    %922 = vmatprep.subr.bf16.mxu0 0
    %923 = vmatpush1.bf16.msra.mxu0 0
    %924 = vmatprep.subr.bf16.mxu0 0
    %925 = vmatpush1.bf16.msra.mxu0 0
    %926 = vmatprep.subr.bf16.mxu0 0
    %927 = vmatpush1.bf16.msra.mxu0 0
    %928 = vmatprep.mubr.bf16.mxu0 0
    %929 = vmatmul.mubr.bf16.gmra.mrb[0].mxu0 %v894
    %v930 = vpop.f32.mrb[0].mxu0
    %v931 = vadd.f32 %v879, %v930
    %v932 = vpop.f32.mrb[0].mxu0
    %v933 = vpop.f32.mrb[0].mxu0
    %v934 = vpop.f32.mrb[0].mxu0
    %935 = vdwg.mxu0
    %v936 = vtanh.pop %v931
    %937 = vst.msk [vmem:[#allocation7] sm:$0xff] %vm107, %v936
    // Predicated region
    $region74: #{tpu_custom_call.1} parent=1 // pred_check
      _
    $region75: #{tpu_custom_call.1} parent=1 // pred_check_branch
      %939 = sbr.rel (0) target = $region77
    $region76: #{tpu_custom_call.1} parent=1 // pred_region
      %s941 = ssub.s32 128, 128
      %942 = vsyncadd [#allocation4], %s941
      %s944 = sshll.u32 [#allocation7], 4
      %s945 = int_to_ptr.vmem [resolvable:$true] %s944
      %947 = dma.vmem_to_hbm [thread:$0]  %s945, 128, %s16, [#allocation4]
    $region77: #{tpu_custom_call.1} parent=1 // pred_fallthru
      _
    // Predicated region
    $region78: #{tpu_custom_call.1} parent=1 // pred_check
      _
    $region79: #{tpu_custom_call.1} parent=1 // pred_check_branch
      %949 = sbr.rel (0) target = $region81
    $region80: #{tpu_custom_call.1} parent=1 // pred_region
      %s951 = ssub.s32 128, 128
      %952 = vsyncadd [#allocation9], %s951
      %s954 = sshll.u32 [#allocation8], 4
      %s955 = int_to_ptr.vmem [resolvable:$true] %s954
      %957 = dma.vmem_to_hbm [thread:$0]  %s955, 128, %s17, [#allocation9]
    $region81: #{tpu_custom_call.1} parent=1 // pred_fallthru
      _
    // Predicated region
    $region82: #{tpu_custom_call.1} parent=1 // pred_check
      _
    $region83: #{tpu_custom_call.1} parent=1 // pred_check_branch
      %959 = sbr.rel (0) target = $region85
    $region84: #{tpu_custom_call.1} parent=1 // pred_region
      %960 = dma.done [#allocation4], 128
    $region85: #{tpu_custom_call.1} parent=1 // pred_fallthru
      _
    // Predicated region
    $region86: #{tpu_custom_call.1} parent=1 // pred_check
      _
    $region87: #{tpu_custom_call.1} parent=1 // pred_check_branch
      %962 = sbr.rel (0) target = $region89
    $region88: #{tpu_custom_call.1} parent=1 // pred_region
      %963 = dma.done [#allocation9], 128
    $region89: #{tpu_custom_call.1} parent=1 // pred_fallthru
      _
    %964 = vsyncpa [#allocation3], 1
    %965 = vsyncpa [#allocation6], 1
    %966 = vsyncpa [#allocation4], 1
    %967 = vsyncpa [#allocation9], 1

// kernel: tpu_custom_call.1
$region0: #{tpu_custom_call.1}
  #allocation0 [shape = 'u32[]', space=smem, size = 0x4, offset = 0x4, fixed_abs, tag = 'smem constant byte address 0x4 - core index']
  #allocation1 [shape = 'u32[144,128]{1,0:T(1,128)}', space=vmem, size = 0x12000, scoped, tag = 'internal scratch']
  %s0 = inlined_call_operand.vmem [shape: bf16[8,8,32], index: 0, kind: input, shape index: {}]
  %s1 = inlined_call_operand.hbm [shape: f32[8,32], index: 1, kind: input, shape index: {}]
  %s2 = inlined_call_operand.hbm [shape: f32[8,32], index: 2, kind: input, shape index: {}]
  %s3 = inlined_call_operand.vmem [shape: bf16[32,16], index: 3, kind: input, shape index: {}]
  %s4 = inlined_call_operand.vmem [shape: f32[1,16], index: 4, kind: input, shape index: {}]
  %s5 = inlined_call_operand.vmem [shape: bf16[32,32], index: 5, kind: input, shape index: {}]
  %s6 = inlined_call_operand.vmem [shape: f32[1,32], index: 6, kind: input, shape index: {}]
  %s7 = inlined_call_operand.vmem [shape: bf16[32,16], index: 7, kind: input, shape index: {}]
  %s8 = inlined_call_operand.vmem [shape: f32[1,16], index: 8, kind: input, shape index: {}]
  %s9 = inlined_call_operand.vmem [shape: bf16[32,32], index: 9, kind: input, shape index: {}]
  %s10 = inlined_call_operand.vmem [shape: f32[1,32], index: 10, kind: input, shape index: {}]
  %s11 = inlined_call_operand.vmem [shape: bf16[32,16], index: 11, kind: input, shape index: {}]
  %s12 = inlined_call_operand.vmem [shape: f32[1,16], index: 12, kind: input, shape index: {}]
  %s13 = inlined_call_operand.vmem [shape: f32[1,16], index: 13, kind: input, shape index: {}]
  %s14 = inlined_call_operand.vmem [shape: bf16[32,32], index: 14, kind: input, shape index: {}]
  %s15 = inlined_call_operand.vmem [shape: f32[1,32], index: 15, kind: input, shape index: {}]
  %s16 = inlined_call_operand.hbm [shape: f32[8,32], index: 16, kind: output, shape index: {0}]
  %s17 = inlined_call_operand.hbm [shape: f32[8,128], index: 17, kind: output, shape index: {1}]
  %18 = xla_tuple %s16, %s17
  %s19 = sld [smem:[#allocation0]]
  $region90: #{tpu_custom_call.1} parent=0
    _
  %s21 = ssub.s32 1, %s19
  %s22 = scalar_select 0, %s21, %s19
  $region1: #{tpu_custom_call.1} parent=0
    #allocation2 [shape = 'u8[4096]{0}', space=vmem, size = 0x1000, scoped, tag = 'input window, operand 1, single buffered']
    #allocation3 [shape = 's32[1]{0}', space=sflag, size = 0x4, scoped, tag = 'scoped memory for tpu_custom_call.1']
    #allocation4 [shape = 's32[1]{0}', space=sflag, size = 0x4, scoped, tag = 'scoped memory for tpu_custom_call.1']
    #allocation5 [shape = 'u8[4096]{0}', space=vmem, size = 0x1000, scoped, tag = 'input window, operand 2, single buffered']
    #allocation6 [shape = 's32[1]{0}', space=sflag, size = 0x4, scoped, tag = 'scoped memory for tpu_custom_call.1']
    #allocation7 [shape = 'u8[4096]{0}', space=vmem, size = 0x1000, scoped, tag = 'output window, operand 0, single buffered']
    #allocation8 [shape = 'u8[4096]{0}', space=vmem, size = 0x1000, scoped, tag = 'output window, operand 1, single buffered']
    #allocation9 [shape = 's32[1]{0}', space=sflag, size = 0x4, scoped, tag = 'scoped memory for tpu_custom_call.1']
    %23 = vsyncpa [#allocation3], 0
    %24 = vsyncpa [#allocation6], 0
    %25 = vsyncpa [#allocation4], 0
    %26 = vsyncpa [#allocation9], 0
    // Predicated region
    $region2: #{tpu_custom_call.1} parent=1 // pred_check
      _
    $region3: #{tpu_custom_call.1} parent=1 // pred_check_branch
      %28 = sbr.rel (0) target = $region5
    $region4: #{tpu_custom_call.1} parent=1 // pred_region
      _
    $region5: #{tpu_custom_call.1} parent=1 // pred_fallthru
      _
    // Predicated region
    $region6: #{tpu_custom_call.1} parent=1 // pred_check
      _
    $region7: #{tpu_custom_call.1} parent=1 // pred_check_branch
      %30 = sbr.rel (0) target = $region9
    $region8: #{tpu_custom_call.1} parent=1 // pred_region
      %s32 = ssub.s32 128, 128
      %33 = vsyncadd [#allocation3], %s32
      %s35 = sshll.u32 [#allocation2], 4
      %s36 = int_to_ptr.vmem [resolvable:$true] %s35
      %38 = dma.hbm_to_vmem [thread:$0]  %s1, 128, %s36, [#allocation3]
    $region9: #{tpu_custom_call.1} parent=1 // pred_fallthru
      _
    // Predicated region
    $region10: #{tpu_custom_call.1} parent=1 // pred_check
      _
    $region11: #{tpu_custom_call.1} parent=1 // pred_check_branch
      %40 = sbr.rel (0) target = $region13
    $region12: #{tpu_custom_call.1} parent=1 // pred_region
      %s42 = ssub.s32 128, 128
      %43 = vsyncadd [#allocation6], %s42
      %s45 = sshll.u32 [#allocation5], 4
      %s46 = int_to_ptr.vmem [resolvable:$true] %s45
      %48 = dma.hbm_to_vmem [thread:$0]  %s2, 128, %s46, [#allocation6]
    $region13: #{tpu_custom_call.1} parent=1 // pred_fallthru
      _
    // Predicated region
    $region14: #{tpu_custom_call.1} parent=1 // pred_check
      _
    $region15: #{tpu_custom_call.1} parent=1 // pred_check_branch
      %50 = sbr.rel (0) target = $region17
    $region16: #{tpu_custom_call.1} parent=1 // pred_region
      _
    $region17: #{tpu_custom_call.1} parent=1 // pred_fallthru
      _
    // Predicated region
    $region18: #{tpu_custom_call.1} parent=1 // pred_check
      _
    $region19: #{tpu_custom_call.1} parent=1 // pred_check_branch
      %52 = sbr.rel (0) target = $region21
    $region20: #{tpu_custom_call.1} parent=1 // pred_region
      _
    $region21: #{tpu_custom_call.1} parent=1 // pred_fallthru
      _
    // Predicated region
    $region22: #{tpu_custom_call.1} parent=1 // pred_check
      _
    $region23: #{tpu_custom_call.1} parent=1 // pred_check_branch
      %54 = sbr.rel (0) target = $region25
    $region24: #{tpu_custom_call.1} parent=1 // pred_region
      _
    $region25: #{tpu_custom_call.1} parent=1 // pred_fallthru
      _
    // Predicated region
    $region26: #{tpu_custom_call.1} parent=1 // pred_check
      _
    $region27: #{tpu_custom_call.1} parent=1 // pred_check_branch
      %56 = sbr.rel (0) target = $region29
    $region28: #{tpu_custom_call.1} parent=1 // pred_region
      _
    $region29: #{tpu_custom_call.1} parent=1 // pred_fallthru
      _
    // Predicated region
    $region30: #{tpu_custom_call.1} parent=1 // pred_check
      _
    $region31: #{tpu_custom_call.1} parent=1 // pred_check_branch
      %58 = sbr.rel (0) target = $region33
    $region32: #{tpu_custom_call.1} parent=1 // pred_region
      _
    $region33: #{tpu_custom_call.1} parent=1 // pred_fallthru
      _
    // Predicated region
    $region34: #{tpu_custom_call.1} parent=1 // pred_check
      _
    $region35: #{tpu_custom_call.1} parent=1 // pred_check_branch
      %60 = sbr.rel (0) target = $region37
    $region36: #{tpu_custom_call.1} parent=1 // pred_region
      _
    $region37: #{tpu_custom_call.1} parent=1 // pred_fallthru
      _
    // Predicated region
    $region38: #{tpu_custom_call.1} parent=1 // pred_check
      _
    $region39: #{tpu_custom_call.1} parent=1 // pred_check_branch
      %62 = sbr.rel (0) target = $region41
    $region40: #{tpu_custom_call.1} parent=1 // pred_region
      _
    $region41: #{tpu_custom_call.1} parent=1 // pred_fallthru
      _
    // Predicated region
    $region42: #{tpu_custom_call.1} parent=1 // pred_check
      _
    $region43: #{tpu_custom_call.1} parent=1 // pred_check_branch
      %64 = sbr.rel (0) target = $region45
    $region44: #{tpu_custom_call.1} parent=1 // pred_region
      _
    $region45: #{tpu_custom_call.1} parent=1 // pred_fallthru
      _
    // Predicated region
    $region46: #{tpu_custom_call.1} parent=1 // pred_check
      _
    $region47: #{tpu_custom_call.1} parent=1 // pred_check_branch
      %66 = sbr.rel (0) target = $region49
    $region48: #{tpu_custom_call.1} parent=1 // pred_region
      _
    $region49: #{tpu_custom_call.1} parent=1 // pred_fallthru
      _
    // Predicated region
    $region50: #{tpu_custom_call.1} parent=1 // pred_check
      _
    $region51: #{tpu_custom_call.1} parent=1 // pred_check_branch
      %68 = sbr.rel (0) target = $region53
    $region52: #{tpu_custom_call.1} parent=1 // pred_region
      _
    $region53: #{tpu_custom_call.1} parent=1 // pred_fallthru
      _
    // Predicated region
    $region54: #{tpu_custom_call.1} parent=1 // pred_check
      _
    $region55: #{tpu_custom_call.1} parent=1 // pred_check_branch
      %70 = sbr.rel (0) target = $region57
    $region56: #{tpu_custom_call.1} parent=1 // pred_region
      _
    $region57: #{tpu_custom_call.1} parent=1 // pred_fallthru
      _
    // Predicated region
    $region58: #{tpu_custom_call.1} parent=1 // pred_check
      _
    $region59: #{tpu_custom_call.1} parent=1 // pred_check_branch
      %72 = sbr.rel (0) target = $region61
    $region60: #{tpu_custom_call.1} parent=1 // pred_region
      _
    $region61: #{tpu_custom_call.1} parent=1 // pred_fallthru
      _
    // Predicated region
    $region62: #{tpu_custom_call.1} parent=1 // pred_check
      _
    $region63: #{tpu_custom_call.1} parent=1 // pred_check_branch
      %74 = sbr.rel (0) target = $region65
    $region64: #{tpu_custom_call.1} parent=1 // pred_region
      _
    $region65: #{tpu_custom_call.1} parent=1 // pred_fallthru
      _
    // Predicated region
    $region66: #{tpu_custom_call.1} parent=1 // pred_check
      _
    $region67: #{tpu_custom_call.1} parent=1 // pred_check_branch
      %76 = sbr.rel (0) target = $region69
    $region68: #{tpu_custom_call.1} parent=1 // pred_region
      %77 = dma.done [#allocation3], 128
    $region69: #{tpu_custom_call.1} parent=1 // pred_fallthru
      _
    // Predicated region
    $region70: #{tpu_custom_call.1} parent=1 // pred_check
      _
    $region71: #{tpu_custom_call.1} parent=1 // pred_check_branch
      %79 = sbr.rel (0) target = $region73
    $region72: #{tpu_custom_call.1} parent=1 // pred_region
      %80 = dma.done [#allocation6], 128
    $region73: #{tpu_custom_call.1} parent=1 // pred_fallthru
      _
    %v82 = vld [vmem:[#allocation5] sm:$0xff]
    %v83 = vpack.c.bf16 %v82, %v82
    %v84 = vld [vmem:[%s5] sm:$0xf]
    %v85 = vld [vmem:[%s5 + $0x4] sm:$0xf]
    %v86 = vld [vmem:[%s5 + $0x8] sm:$0xf]
    %v87 = vld [vmem:[%s5 + $0xc] sm:$0xf]
    %v88 = vld [vmem:[%s6] sm:$0x1]
    %v90 = vlaneseq
    %v91 = vshrl.u32 %v90, 7
    %v92 = vsub.s32 0, %v91
    %v93 = vrot.slane %v88, %v92
    %v99 = vunpack.c.l.b16 %v84
    %v100 = vunpack.c.l.b16 %v85
    %v101 = vunpack.c.l.b16 %v86
    %v102 = vunpack.c.l.b16 %v87
    %v103 = vpack.c.b16 %v100, %v99
    %v104 = vpack.c.b16 %v102, %v101
    %vm107 = vcmask 261120
    %v109 = vsel %vm107, %v83, 0
    %111 = vmatprep.subr.bf16.mxu0 0
    %112 = vmatpush1.bf16.msra.mxu0 %v103
    %113 = vmatprep.subr.bf16.mxu0 0
    %114 = vmatpush1.bf16.msra.mxu0 %v104
    %115 = vmatprep.subr.bf16.mxu0 0
    %116 = vmatpush1.bf16.msra.mxu0 0
    %117 = vmatprep.subr.bf16.mxu0 0
    %118 = vmatpush1.bf16.msra.mxu0 0
    %119 = vmatprep.subr.bf16.mxu0 0
    %120 = vmatpush1.bf16.msra.mxu0 0
    %121 = vmatprep.subr.bf16.mxu0 0
    %122 = vmatpush1.bf16.msra.mxu0 0
    %123 = vmatprep.subr.bf16.mxu0 0
    %124 = vmatpush1.bf16.msra.mxu0 0
    %125 = vmatprep.subr.bf16.mxu0 0
    %126 = vmatpush1.bf16.msra.mxu0 0
    %127 = vmatprep.subr.bf16.mxu0 0
    %128 = vmatpush1.bf16.msra.mxu0 0
    %129 = vmatprep.subr.bf16.mxu0 0
    %130 = vmatpush1.bf16.msra.mxu0 0
    %131 = vmatprep.subr.bf16.mxu0 0
    %132 = vmatpush1.bf16.msra.mxu0 0
    %133 = vmatprep.subr.bf16.mxu0 0
    %134 = vmatpush1.bf16.msra.mxu0 0
    %135 = vmatprep.subr.bf16.mxu0 0
    %136 = vmatpush1.bf16.msra.mxu0 0
    %137 = vmatprep.subr.bf16.mxu0 0
    %138 = vmatpush1.bf16.msra.mxu0 0
    %139 = vmatprep.subr.bf16.mxu0 0
    %140 = vmatpush1.bf16.msra.mxu0 0
    %141 = vmatprep.subr.bf16.mxu0 0
    %142 = vmatpush1.bf16.msra.mxu0 0
    %143 = vmatprep.mubr.bf16.mxu0 0
    %144 = vmatmul.mubr.bf16.gmra.mrb[0].mxu0 %v109
    %v145 = vpop.f32.mrb[0].mxu0
    %v146 = vadd.f32 %v93, %v145
    %v147 = vpop.f32.mrb[0].mxu0
    %v148 = vpop.f32.mrb[0].mxu0
    %v149 = vpop.f32.mrb[0].mxu0
    %150 = vdwg.mxu0
    %v151 = vmax.f32 %v146, 0.0
    %v152 = vpack.c.bf16 %v151, %v151
    %v153 = vld [vmem:[%s7] sm:$0xf]
    %v154 = vld [vmem:[%s7 + $0x4] sm:$0xf]
    %v155 = vld [vmem:[%s7 + $0x8] sm:$0xf]
    %v156 = vld [vmem:[%s7 + $0xc] sm:$0xf]
    %v157 = vld [vmem:[%s8] sm:$0x1]
    %v159 = vlaneseq
    %v160 = vshrl.u32 %v159, 7
    %v161 = vsub.s32 0, %v160
    %v162 = vrot.slane %v157, %v161
    %v168 = vunpack.c.l.b16 %v153
    %v169 = vunpack.c.l.b16 %v154
    %v170 = vunpack.c.l.b16 %v155
    %v171 = vunpack.c.l.b16 %v156
    %v172 = vpack.c.b16 %v169, %v168
    %v173 = vpack.c.b16 %v171, %v170
    %v177 = vsel %vm107, %v152, 0
    %179 = vmatprep.subr.bf16.mxu0 0
    %180 = vmatpush1.bf16.msra.mxu0 %v172
    %181 = vmatprep.subr.bf16.mxu0 0
    %182 = vmatpush1.bf16.msra.mxu0 %v173
    %183 = vmatprep.subr.bf16.mxu0 0
    %184 = vmatpush1.bf16.msra.mxu0 0
    %185 = vmatprep.subr.bf16.mxu0 0
    %186 = vmatpush1.bf16.msra.mxu0 0
    %187 = vmatprep.subr.bf16.mxu0 0
    %188 = vmatpush1.bf16.msra.mxu0 0
    %189 = vmatprep.subr.bf16.mxu0 0
    %190 = vmatpush1.bf16.msra.mxu0 0
    %191 = vmatprep.subr.bf16.mxu0 0
    %192 = vmatpush1.bf16.msra.mxu0 0
    %193 = vmatprep.subr.bf16.mxu0 0
    %194 = vmatpush1.bf16.msra.mxu0 0
    %195 = vmatprep.subr.bf16.mxu0 0
    %196 = vmatpush1.bf16.msra.mxu0 0
    %197 = vmatprep.subr.bf16.mxu0 0
    %198 = vmatpush1.bf16.msra.mxu0 0
    %199 = vmatprep.subr.bf16.mxu0 0
    %200 = vmatpush1.bf16.msra.mxu0 0
    %201 = vmatprep.subr.bf16.mxu0 0
    %202 = vmatpush1.bf16.msra.mxu0 0
    %203 = vmatprep.subr.bf16.mxu0 0
    %204 = vmatpush1.bf16.msra.mxu0 0
    %205 = vmatprep.subr.bf16.mxu0 0
    %206 = vmatpush1.bf16.msra.mxu0 0
    %207 = vmatprep.subr.bf16.mxu0 0
    %208 = vmatpush1.bf16.msra.mxu0 0
    %209 = vmatprep.subr.bf16.mxu0 0
    %210 = vmatpush1.bf16.msra.mxu0 0
    %211 = vmatprep.mubr.bf16.mxu0 0
    %212 = vmatmul.mubr.bf16.gmra.mrb[0].mxu0 %v177
    %v213 = vpop.f32.mrb[0].mxu0
    %v214 = vadd.f32 %v162, %v213
    %v215 = vpop.f32.mrb[0].mxu0
    %v216 = vpop.f32.mrb[0].mxu0
    %v217 = vpop.f32.mrb[0].mxu0
    %218 = vdwg.mxu0
    %v219 = vld [vmem:[#allocation2] sm:$0xff]
    %v220 = vpack.c.bf16 %v219, %v219
    %v221 = vld [vmem:[%s9] sm:$0xf]
    %v222 = vld [vmem:[%s9 + $0x4] sm:$0xf]
    %v223 = vld [vmem:[%s9 + $0x8] sm:$0xf]
    %v224 = vld [vmem:[%s9 + $0xc] sm:$0xf]
    %v225 = vld [vmem:[%s10] sm:$0x1]
    %v227 = vlaneseq
    %v228 = vshrl.u32 %v227, 7
    %v229 = vsub.s32 0, %v228
    %v230 = vrot.slane %v225, %v229
    %v236 = vunpack.c.l.b16 %v221
    %v237 = vunpack.c.l.b16 %v222
    %v238 = vunpack.c.l.b16 %v223
    %v239 = vunpack.c.l.b16 %v224
    %v240 = vpack.c.b16 %v237, %v236
    %v241 = vpack.c.b16 %v239, %v238
    %v245 = vsel %vm107, %v220, 0
    %247 = vmatprep.subr.bf16.mxu0 0
    %248 = vmatpush1.bf16.msra.mxu0 %v240
    %249 = vmatprep.subr.bf16.mxu0 0
    %250 = vmatpush1.bf16.msra.mxu0 %v241
    %251 = vmatprep.subr.bf16.mxu0 0
    %252 = vmatpush1.bf16.msra.mxu0 0
    %253 = vmatprep.subr.bf16.mxu0 0
    %254 = vmatpush1.bf16.msra.mxu0 0
    %255 = vmatprep.subr.bf16.mxu0 0
    %256 = vmatpush1.bf16.msra.mxu0 0
    %257 = vmatprep.subr.bf16.mxu0 0
    %258 = vmatpush1.bf16.msra.mxu0 0
    %259 = vmatprep.subr.bf16.mxu0 0
    %260 = vmatpush1.bf16.msra.mxu0 0
    %261 = vmatprep.subr.bf16.mxu0 0
    %262 = vmatpush1.bf16.msra.mxu0 0
    %263 = vmatprep.subr.bf16.mxu0 0
    %264 = vmatpush1.bf16.msra.mxu0 0
    %265 = vmatprep.subr.bf16.mxu0 0
    %266 = vmatpush1.bf16.msra.mxu0 0
    %267 = vmatprep.subr.bf16.mxu0 0
    %268 = vmatpush1.bf16.msra.mxu0 0
    %269 = vmatprep.subr.bf16.mxu0 0
    %270 = vmatpush1.bf16.msra.mxu0 0
    %271 = vmatprep.subr.bf16.mxu0 0
    %272 = vmatpush1.bf16.msra.mxu0 0
    %273 = vmatprep.subr.bf16.mxu0 0
    %274 = vmatpush1.bf16.msra.mxu0 0
    %275 = vmatprep.subr.bf16.mxu0 0
    %276 = vmatpush1.bf16.msra.mxu0 0
    %277 = vmatprep.subr.bf16.mxu0 0
    %278 = vmatpush1.bf16.msra.mxu0 0
    %279 = vmatprep.mubr.bf16.mxu0 0
    %280 = vmatmul.mubr.bf16.gmra.mrb[0].mxu0 %v245
    %v281 = vpop.f32.mrb[0].mxu0
    %v282 = vadd.f32 %v230, %v281
    %v283 = vpop.f32.mrb[0].mxu0
    %v284 = vpop.f32.mrb[0].mxu0
    %v285 = vpop.f32.mrb[0].mxu0
    %286 = vdwg.mxu0
    %v287 = vtanh.pop %v282
    %v288 = vpack.c.bf16 %v287, %v287
    %v289 = vld [vmem:[%s11] sm:$0xf]
    %v290 = vld [vmem:[%s11 + $0x4] sm:$0xf]
    %v291 = vld [vmem:[%s11 + $0x8] sm:$0xf]
    %v292 = vld [vmem:[%s11 + $0xc] sm:$0xf]
    %v293 = vld [vmem:[%s12] sm:$0x1]
    %v295 = vlaneseq
    %v296 = vshrl.u32 %v295, 7
    %v297 = vsub.s32 0, %v296
    %v298 = vrot.slane %v293, %v297
    %v304 = vunpack.c.l.b16 %v289
    %v305 = vunpack.c.l.b16 %v290
    %v306 = vunpack.c.l.b16 %v291
    %v307 = vunpack.c.l.b16 %v292
    %v308 = vpack.c.b16 %v305, %v304
    %v309 = vpack.c.b16 %v307, %v306
    %v313 = vsel %vm107, %v288, 0
    %315 = vmatprep.subr.bf16.mxu0 0
    %316 = vmatpush1.bf16.msra.mxu0 %v308
    %317 = vmatprep.subr.bf16.mxu0 0
    %318 = vmatpush1.bf16.msra.mxu0 %v309
    %319 = vmatprep.subr.bf16.mxu0 0
    %320 = vmatpush1.bf16.msra.mxu0 0
    %321 = vmatprep.subr.bf16.mxu0 0
    %322 = vmatpush1.bf16.msra.mxu0 0
    %323 = vmatprep.subr.bf16.mxu0 0
    %324 = vmatpush1.bf16.msra.mxu0 0
    %325 = vmatprep.subr.bf16.mxu0 0
    %326 = vmatpush1.bf16.msra.mxu0 0
    %327 = vmatprep.subr.bf16.mxu0 0
    %328 = vmatpush1.bf16.msra.mxu0 0
    %329 = vmatprep.subr.bf16.mxu0 0
    %330 = vmatpush1.bf16.msra.mxu0 0
    %331 = vmatprep.subr.bf16.mxu0 0
    %332 = vmatpush1.bf16.msra.mxu0 0
    %333 = vmatprep.subr.bf16.mxu0 0
    %334 = vmatpush1.bf16.msra.mxu0 0
    %335 = vmatprep.subr.bf16.mxu0 0
    %336 = vmatpush1.bf16.msra.mxu0 0
    %337 = vmatprep.subr.bf16.mxu0 0
    %338 = vmatpush1.bf16.msra.mxu0 0
    %339 = vmatprep.subr.bf16.mxu0 0
    %340 = vmatpush1.bf16.msra.mxu0 0
    %341 = vmatprep.subr.bf16.mxu0 0
    %342 = vmatpush1.bf16.msra.mxu0 0
    %343 = vmatprep.subr.bf16.mxu0 0
    %344 = vmatpush1.bf16.msra.mxu0 0
    %345 = vmatprep.subr.bf16.mxu0 0
    %346 = vmatpush1.bf16.msra.mxu0 0
    %347 = vmatprep.mubr.bf16.mxu0 0
    %348 = vmatmul.mubr.bf16.gmra.mrb[0].mxu0 %v313
    %v349 = vpop.f32.mrb[0].mxu0
    %v350 = vadd.f32 %v298, %v349
    %v351 = vpop.f32.mrb[0].mxu0
    %v352 = vpop.f32.mrb[0].mxu0
    %v353 = vpop.f32.mrb[0].mxu0
    %354 = vdwg.mxu0
    %v355 = vld [vmem:[%s13] sm:$0x1]
    %v357 = vcombine.high %v350, %v350
    %v359 = vunpack.c.l.s4 1966171168
    %v360 = vunpack.c.0.s8 %v359
    %v361 = vlaneseq
    %v362 = vshrl.u32 %v361, 7
    %v363 = vsub.s32 %v360, %v362
    %v364 = vrot.slane %v350, %v363
    %v366 = vunpack.c.l.s4 1966171168
    %v367 = vunpack.c.0.s8 %v366
    %v368 = vlaneseq
    %v369 = vshrl.u32 %v368, 7
    %v370 = vsub.s32 %v367, %v369
    %v371 = vrot.slane %v357, %v370
    %v372 = vcombine.high %v364, %v364
    %v373 = vcombine.high %v371, %v371
    %v375 = vunpack.c.l.s4 1966171168
    %v376 = vunpack.c.0.s8 %v375
    %v377 = vlaneseq
    %v378 = vshrl.u32 %v377, 7
    %v379 = vsub.s32 %v376, %v378
    %v380 = vrot.slane %v364, %v379
    %v382 = vunpack.c.l.s4 1966171168
    %v383 = vunpack.c.0.s8 %v382
    %v384 = vlaneseq
    %v385 = vshrl.u32 %v384, 7
    %v386 = vsub.s32 %v383, %v385
    %v387 = vrot.slane %v371, %v386
    %v389 = vunpack.c.l.s4 1966171168
    %v390 = vunpack.c.0.s8 %v389
    %v391 = vlaneseq
    %v392 = vshrl.u32 %v391, 7
    %v393 = vsub.s32 %v390, %v392
    %v394 = vrot.slane %v372, %v393
    %v396 = vunpack.c.l.s4 1966171168
    %v397 = vunpack.c.0.s8 %v396
    %v398 = vlaneseq
    %v399 = vshrl.u32 %v398, 7
    %v400 = vsub.s32 %v397, %v399
    %v401 = vrot.slane %v373, %v400
    %v402 = vcombine.high %v380, %v380
    %v403 = vcombine.high %v387, %v387
    %v404 = vcombine.high %v394, %v394
    %v405 = vcombine.high %v401, %v401
    %v406 = vld [vmem:[%s0] sm:$0xf]
    %v407 = vld [vmem:[%s0 + $0x4] sm:$0xf]
    %v408 = vld [vmem:[%s0 + $0x8] sm:$0xf]
    %v409 = vld [vmem:[%s0 + $0xc] sm:$0xf]
    %v410 = vld [vmem:[%s0 + $0x10] sm:$0xf]
    %v411 = vld [vmem:[%s0 + $0x14] sm:$0xf]
    %v412 = vld [vmem:[%s0 + $0x18] sm:$0xf]
    %v413 = vld [vmem:[%s0 + $0x1c] sm:$0xf]
    %v414 = vld [vmem:[%s3] sm:$0xf]
    %v415 = vld [vmem:[%s3 + $0x4] sm:$0xf]
    %v416 = vld [vmem:[%s3 + $0x8] sm:$0xf]
    %v417 = vld [vmem:[%s3 + $0xc] sm:$0xf]
    %v418 = vld [vmem:[%s4] sm:$0x1]
    %v420 = vlaneseq
    %v421 = vshrl.u32 %v420, 7
    %v422 = vsub.s32 0, %v421
    %v423 = vrot.slane %v418, %v422
    %v433 = vunpack.c.l.b16 %v406
    %v434 = vunpack.c.l.b16 %v407
    %v435 = vunpack.c.l.b16 %v408
    %v436 = vunpack.c.l.b16 %v409
    %v437 = vunpack.c.l.b16 %v410
    %v438 = vunpack.c.l.b16 %v411
    %v439 = vunpack.c.l.b16 %v412
    %v440 = vunpack.c.l.b16 %v413
    %v441 = vpack.c.b16 %v434, %v433
    %v442 = vpack.c.b16 %v436, %v435
    %v443 = vpack.c.b16 %v438, %v437
    %v444 = vpack.c.b16 %v440, %v439
    %v449 = vunpack.c.l.b16 %v414
    %v450 = vunpack.c.l.b16 %v415
    %v451 = vunpack.c.l.b16 %v416
    %v452 = vunpack.c.l.b16 %v417
    %v453 = vpack.c.b16 %v450, %v449
    %v454 = vpack.c.b16 %v452, %v451
    %v458 = vsel %vm107, %v441, 0
    %v461 = vsel %vm107, %v442, 0
    %v464 = vsel %vm107, %v443, 0
    %v467 = vsel %vm107, %v444, 0
    %469 = vmatprep.subr.bf16.mxu0 0
    %470 = vmatpush1.bf16.msra.mxu0 %v453
    %471 = vmatprep.subr.bf16.mxu0 0
    %472 = vmatpush1.bf16.msra.mxu0 %v454
    %473 = vmatprep.subr.bf16.mxu0 0
    %474 = vmatpush1.bf16.msra.mxu0 0
    %475 = vmatprep.subr.bf16.mxu0 0
    %476 = vmatpush1.bf16.msra.mxu0 0
    %477 = vmatprep.subr.bf16.mxu0 0
    %478 = vmatpush1.bf16.msra.mxu0 0
    %479 = vmatprep.subr.bf16.mxu0 0
    %480 = vmatpush1.bf16.msra.mxu0 0
    %481 = vmatprep.subr.bf16.mxu0 0
    %482 = vmatpush1.bf16.msra.mxu0 0
    %483 = vmatprep.subr.bf16.mxu0 0
    %484 = vmatpush1.bf16.msra.mxu0 0
    %485 = vmatprep.subr.bf16.mxu0 0
    %486 = vmatpush1.bf16.msra.mxu0 0
    %487 = vmatprep.subr.bf16.mxu0 0
    %488 = vmatpush1.bf16.msra.mxu0 0
    %489 = vmatprep.subr.bf16.mxu0 0
    %490 = vmatpush1.bf16.msra.mxu0 0
    %491 = vmatprep.subr.bf16.mxu0 0
    %492 = vmatpush1.bf16.msra.mxu0 0
    %493 = vmatprep.subr.bf16.mxu0 0
    %494 = vmatpush1.bf16.msra.mxu0 0
    %495 = vmatprep.subr.bf16.mxu0 0
    %496 = vmatpush1.bf16.msra.mxu0 0
    %497 = vmatprep.subr.bf16.mxu0 0
    %498 = vmatpush1.bf16.msra.mxu0 0
    %499 = vmatprep.subr.bf16.mxu0 0
    %500 = vmatpush1.bf16.msra.mxu0 0
    %501 = vmatprep.mubr.bf16.mxu0 0
    %502 = vmatmul.mubr.bf16.gmra.mrb[0].mxu0 %v458
    %v503 = vpop.f32.mrb[0].mxu0
    %v504 = vadd.f32 %v423, %v503
    %v505 = vpop.f32.mrb[0].mxu0
    %v506 = vpop.f32.mrb[0].mxu0
    %v507 = vadd.f32 %v423, %v506
    %v508 = vpop.f32.mrb[0].mxu0
    %509 = vmatprep.mubr.bf16.mxu0 0
    %510 = vmatmul.mubr.bf16.gmra.mrb[0].mxu0 %v461
    %v511 = vpop.f32.mrb[0].mxu0
    %v512 = vadd.f32 %v423, %v511
    %v513 = vpop.f32.mrb[0].mxu0
    %v514 = vpop.f32.mrb[0].mxu0
    %v515 = vadd.f32 %v423, %v514
    %v516 = vpop.f32.mrb[0].mxu0
    %517 = vmatprep.mubr.bf16.mxu0 0
    %518 = vmatmul.mubr.bf16.gmra.mrb[0].mxu0 %v464
    %v519 = vpop.f32.mrb[0].mxu0
    %v520 = vadd.f32 %v423, %v519
    %v521 = vpop.f32.mrb[0].mxu0
    %v522 = vpop.f32.mrb[0].mxu0
    %v523 = vadd.f32 %v423, %v522
    %v524 = vpop.f32.mrb[0].mxu0
    %525 = vmatprep.mubr.bf16.mxu0 0
    %526 = vmatmul.mubr.bf16.gmra.mrb[0].mxu0 %v467
    %v527 = vpop.f32.mrb[0].mxu0
    %v528 = vadd.f32 %v423, %v527
    %v529 = vpop.f32.mrb[0].mxu0
    %v530 = vpop.f32.mrb[0].mxu0
    %v531 = vadd.f32 %v423, %v530
    %v532 = vpop.f32.mrb[0].mxu0
    %533 = vdwg.mxu0
    %v534 = vlaneseq
    %v535 = vshrl.u32 %v534, 7
    %v536 = vsub.s32 0, %v535
    %v537 = vrot.slane %v380, %v536
    %v538 = vlaneseq
    %v539 = vshrl.u32 %v538, 7
    %v540 = vsub.s32 0, %v539
    %v541 = vrot.slane %v394, %v540
    %v542 = vlaneseq
    %v543 = vshrl.u32 %v542, 7
    %v544 = vsub.s32 0, %v543
    %v545 = vrot.slane %v402, %v544
    %v546 = vlaneseq
    %v547 = vshrl.u32 %v546, 7
    %v548 = vsub.s32 0, %v547
    %v549 = vrot.slane %v404, %v548
    %v550 = vlaneseq
    %v551 = vshrl.u32 %v550, 7
    %v552 = vsub.s32 0, %v551
    %v553 = vrot.slane %v387, %v552
    %v554 = vlaneseq
    %v555 = vshrl.u32 %v554, 7
    %v556 = vsub.s32 0, %v555
    %v557 = vrot.slane %v401, %v556
    %v558 = vlaneseq
    %v559 = vshrl.u32 %v558, 7
    %v560 = vsub.s32 0, %v559
    %v561 = vrot.slane %v403, %v560
    %v562 = vlaneseq
    %v563 = vshrl.u32 %v562, 7
    %v564 = vsub.s32 0, %v563
    %v565 = vrot.slane %v405, %v564
    %v574 = vadd.f32 %v504, %v537
    %v575 = vadd.f32 %v507, %v541
    %v576 = vadd.f32 %v512, %v545
    %v577 = vadd.f32 %v515, %v549
    %v578 = vadd.f32 %v520, %v553
    %v579 = vadd.f32 %v523, %v557
    %v580 = vadd.f32 %v528, %v561
    %v581 = vadd.f32 %v531, %v565
    %v582 = vtanh.pop %v574
    %v583 = vtanh.pop %v575
    %v584 = vtanh.pop %v576
    %v585 = vtanh.pop %v577
    %v586 = vtanh.pop %v578
    %v587 = vtanh.pop %v579
    %v588 = vtanh.pop %v580
    %v589 = vtanh.pop %v581
    %v591 = vlaneseq
    %v592 = vshrl.u32 %v591, 7
    %v593 = vsub.s32 0, %v592
    %v594 = vrot.slane %v355, %v593
    %v596 = vmul.f32 %v582, %v594
    %v597 = vmul.f32 %v583, %v594
    %v598 = vmul.f32 %v584, %v594
    %v599 = vmul.f32 %v585, %v594
    %v600 = vmul.f32 %v586, %v594
    %v601 = vmul.f32 %v587, %v594
    %v602 = vmul.f32 %v588, %v594
    %v603 = vmul.f32 %v589, %v594
    %vm604 = vcmask 130048
    %v605 = vsel %vm604, %v596, 0.0
    %606 = vadd.xlane.f32.xlu0 %v605
    %v607 = vpop.xlane.xlu0 %606
    %v608 = vsel %vm604, %v597, 0.0
    %609 = vadd.xlane.f32.xlu0 %v608
    %v610 = vpop.xlane.xlu0 %609
    %v611 = vsel %vm604, %v598, 0.0
    %612 = vadd.xlane.f32.xlu0 %v611
    %v613 = vpop.xlane.xlu0 %612
    %v614 = vsel %vm604, %v599, 0.0
    %615 = vadd.xlane.f32.xlu0 %v614
    %v616 = vpop.xlane.xlu0 %615
    %v617 = vsel %vm604, %v600, 0.0
    %618 = vadd.xlane.f32.xlu0 %v617
    %v619 = vpop.xlane.xlu0 %618
    %v620 = vsel %vm604, %v601, 0.0
    %621 = vadd.xlane.f32.xlu0 %v620
    %v622 = vpop.xlane.xlu0 %621
    %v623 = vsel %vm604, %v602, 0.0
    %624 = vadd.xlane.f32.xlu0 %v623
    %v625 = vpop.xlane.xlu0 %624
    %v626 = vsel %vm604, %v603, 0.0
    %627 = vadd.xlane.f32.xlu0 %v626
    %v628 = vpop.xlane.xlu0 %627
    %v629 = vadd.f32 %v214, %v350
    %v630 = vtanh.pop %v629
    %v631 = vmul.f32 %v630, %v594
    %v632 = vsel %vm604, %v631, 0.0
    %633 = vadd.xlane.f32.xlu0 %v632
    %v634 = vpop.xlane.xlu0 %633
    %v643 = vlaneseq
    %v644 = vand.u32 %v643, 127
    %v645 = vlaneseq
    %v646 = vshrl.u32 %v645, 7
    %v647 = vsub.s32 %v644, %v646
    %v648 = vrot.slane %v607, %v647
    %v649 = vlaneseq
    %v650 = vshrl.u32 %v649, 7
    %v651 = vsub.s32 %v644, %v650
    %v652 = vrot.slane %v610, %v651
    %v653 = vlaneseq
    %v654 = vshrl.u32 %v653, 7
    %v655 = vsub.s32 %v644, %v654
    %v656 = vrot.slane %v613, %v655
    %v657 = vlaneseq
    %v658 = vshrl.u32 %v657, 7
    %v659 = vsub.s32 %v644, %v658
    %v660 = vrot.slane %v616, %v659
    %v661 = vlaneseq
    %v662 = vshrl.u32 %v661, 7
    %v663 = vsub.s32 %v644, %v662
    %v664 = vrot.slane %v619, %v663
    %v665 = vlaneseq
    %v666 = vshrl.u32 %v665, 7
    %v667 = vsub.s32 %v644, %v666
    %v668 = vrot.slane %v622, %v667
    %v669 = vlaneseq
    %v670 = vshrl.u32 %v669, 7
    %v671 = vsub.s32 %v644, %v670
    %v672 = vrot.slane %v625, %v671
    %v673 = vlaneseq
    %v674 = vshrl.u32 %v673, 7
    %v675 = vsub.s32 %v644, %v674
    %v676 = vrot.slane %v628, %v675
    %vm677 = vcmask 1041409
    %v678 = vsel %vm677, %v652, %v648
    %vm679 = vcmask 1042434
    %v680 = vsel %vm679, %v656, %v678
    %vm681 = vcmask 1043459
    %v682 = vsel %vm681, %v660, %v680
    %vm683 = vcmask 1044484
    %v684 = vsel %vm683, %v664, %v682
    %vm685 = vcmask 1045509
    %v686 = vsel %vm685, %v668, %v684
    %vm687 = vcmask 1046534
    %v688 = vsel %vm687, %v672, %v686
    %vm689 = vcmask 1047559
    %v690 = vsel %vm689, %v676, %v688
    %vm692 = vcmask 64512
    %v693 = vsel %vm692, %v690, -1e+30
    %vm694 = vcmp.lt.s32.totalorder %v644, 8
    %vm695 = vcmp.eq.s32.totalorder %v644, 8
    %v696 = vsel %vm695, %v634, -1e+30
    %v697 = vsel %vm694, %v693, %v696
    %698 = vmax.xlane.f32.xlu0 %v697
    %v699 = vpop.xlane.xlu0 %698
    %v700 = vsub.f32 %v697, %v699
    %v701 = vmul.f32 %v700, 1.442695
    %v702 = vpow.pop %v701
    %703 = vadd.xlane.f32.xlu0 %v702
    %v704 = vpop.xlane.xlu0 %703
    %v705 = vrcp.pop %v704
    %v706 = vmul.f32 1.0, %v705
    %v707 = vmul.f32 %v702, %v706
    %708 = vst [vmem:[#allocation8] sm:$0xff] %v707
    %710 = vset.pattern.permute.xlu0 8
    %711 = vperm.xlu0 %710, %v707
    %v712 = vpop.permute.xlu0 %711
    %v714 = vmul.f32 %v712, %v151
    %v715 = vld [vmem:[%s0] sm:$0xf]
    %v716 = vld [vmem:[%s0 + $0x4] sm:$0xf]
    %v717 = vld [vmem:[%s0 + $0x8] sm:$0xf]
    %v718 = vld [vmem:[%s0 + $0xc] sm:$0xf]
    %v719 = vld [vmem:[%s0 + $0x10] sm:$0xf]
    %v720 = vld [vmem:[%s0 + $0x14] sm:$0xf]
    %v721 = vld [vmem:[%s0 + $0x18] sm:$0xf]
    %v722 = vld [vmem:[%s0 + $0x1c] sm:$0xf]
    %v723 = vunpack.c.l.bf16 %v715
    %v724 = vunpack.c.l.bf16 %v716
    %v725 = vunpack.c.l.bf16 %v717
    %v726 = vunpack.c.l.bf16 %v718
    %v727 = vunpack.c.l.bf16 %v719
    %v728 = vunpack.c.l.bf16 %v720
    %v729 = vunpack.c.l.bf16 %v721
    %v730 = vunpack.c.l.bf16 %v722
    %v731 = vlaneseq
    %v732 = vshrl.u32 %v731, 7
    %v733 = vsub.s32 0, %v732
    %v734 = vrot.slane %v707, %v733
    %736 = vbcast.lane.b32.xlu0 %v734, 256
    %v737 = vpop.permute.xlu0 %736
    %v738 = vlaneseq
    %v739 = vshrl.u32 %v738, 7
    %v740 = vsub.s32 1, %v739
    %v741 = vrot.slane %v707, %v740
    %743 = vbcast.lane.b32.xlu0 %v741, 256
    %v744 = vpop.permute.xlu0 %743
    %v745 = vlaneseq
    %v746 = vshrl.u32 %v745, 7
    %v747 = vsub.s32 2, %v746
    %v748 = vrot.slane %v707, %v747
    %750 = vbcast.lane.b32.xlu0 %v748, 256
    %v751 = vpop.permute.xlu0 %750
    %v752 = vlaneseq
    %v753 = vshrl.u32 %v752, 7
    %v754 = vsub.s32 3, %v753
    %v755 = vrot.slane %v707, %v754
    %757 = vbcast.lane.b32.xlu0 %v755, 256
    %v758 = vpop.permute.xlu0 %757
    %v759 = vlaneseq
    %v760 = vshrl.u32 %v759, 7
    %v761 = vsub.s32 4, %v760
    %v762 = vrot.slane %v707, %v761
    %764 = vbcast.lane.b32.xlu0 %v762, 256
    %v765 = vpop.permute.xlu0 %764
    %v766 = vlaneseq
    %v767 = vshrl.u32 %v766, 7
    %v768 = vsub.s32 5, %v767
    %v769 = vrot.slane %v707, %v768
    %771 = vbcast.lane.b32.xlu0 %v769, 256
    %v772 = vpop.permute.xlu0 %771
    %v773 = vlaneseq
    %v774 = vshrl.u32 %v773, 7
    %v775 = vsub.s32 6, %v774
    %v776 = vrot.slane %v707, %v775
    %778 = vbcast.lane.b32.xlu0 %v776, 256
    %v779 = vpop.permute.xlu0 %778
    %v780 = vlaneseq
    %v781 = vshrl.u32 %v780, 7
    %v782 = vsub.s32 7, %v781
    %v783 = vrot.slane %v707, %v782
    %785 = vbcast.lane.b32.xlu0 %v783, 256
    %v786 = vpop.permute.xlu0 %785
    %v787 = vmul.f32 %v723, %v737
    %v788 = vmul.f32 %v724, %v744
    %v789 = vmul.f32 %v725, %v751
    %v790 = vmul.f32 %v726, %v758
    %v791 = vmul.f32 %v727, %v765
    %v792 = vmul.f32 %v728, %v772
    %v793 = vmul.f32 %v729, %v779
    %v794 = vmul.f32 %v730, %v786
    %v795 = vsel %vm107, %v787, 0.0
    %v796 = vrot.slane %v795, 4
    %v797 = vadd.f32 %v795, %v796
    %v798 = vrot.slane %v797, 2
    %v799 = vadd.f32 %v797, %v798
    %v800 = vrot.slane %v799, 1
    %v801 = vadd.f32 %v799, %v800
    %v802 = vsel %vm107, %v788, 0.0
    %v803 = vrot.slane %v802, 4
    %v804 = vadd.f32 %v802, %v803
    %v805 = vrot.slane %v804, 2
    %v806 = vadd.f32 %v804, %v805
    %v807 = vrot.slane %v806, 1
    %v808 = vadd.f32 %v806, %v807
    %v809 = vsel %vm107, %v789, 0.0
    %v810 = vrot.slane %v809, 4
    %v811 = vadd.f32 %v809, %v810
    %v812 = vrot.slane %v811, 2
    %v813 = vadd.f32 %v811, %v812
    %v814 = vrot.slane %v813, 1
    %v815 = vadd.f32 %v813, %v814
    %v816 = vsel %vm107, %v790, 0.0
    %v817 = vrot.slane %v816, 4
    %v818 = vadd.f32 %v816, %v817
    %v819 = vrot.slane %v818, 2
    %v820 = vadd.f32 %v818, %v819
    %v821 = vrot.slane %v820, 1
    %v822 = vadd.f32 %v820, %v821
    %v823 = vsel %vm107, %v791, 0.0
    %v824 = vrot.slane %v823, 4
    %v825 = vadd.f32 %v823, %v824
    %v826 = vrot.slane %v825, 2
    %v827 = vadd.f32 %v825, %v826
    %v828 = vrot.slane %v827, 1
    %v829 = vadd.f32 %v827, %v828
    %v830 = vsel %vm107, %v792, 0.0
    %v831 = vrot.slane %v830, 4
    %v832 = vadd.f32 %v830, %v831
    %v833 = vrot.slane %v832, 2
    %v834 = vadd.f32 %v832, %v833
    %v835 = vrot.slane %v834, 1
    %v836 = vadd.f32 %v834, %v835
    %v837 = vsel %vm107, %v793, 0.0
    %v838 = vrot.slane %v837, 4
    %v839 = vadd.f32 %v837, %v838
    %v840 = vrot.slane %v839, 2
    %v841 = vadd.f32 %v839, %v840
    %v842 = vrot.slane %v841, 1
    %v843 = vadd.f32 %v841, %v842
    %v844 = vsel %vm107, %v794, 0.0
    %v845 = vrot.slane %v844, 4
    %v846 = vadd.f32 %v844, %v845
    %v847 = vrot.slane %v846, 2
    %v848 = vadd.f32 %v846, %v847
    %v849 = vrot.slane %v848, 1
    %v850 = vadd.f32 %v848, %v849
    %v859 = vsel %vm677, %v808, %v801
    %v860 = vsel %vm679, %v815, %v859
    %v861 = vsel %vm681, %v822, %v860
    %v862 = vsel %vm683, %v829, %v861
    %v863 = vsel %vm685, %v836, %v862
    %v864 = vsel %vm687, %v843, %v863
    %v865 = vsel %vm689, %v850, %v864
    %v867 = vadd.f32 %v714, %v865
    %v868 = vadd.f32 %v867, %v287
    %v869 = vpack.c.bf16 %v868, %v868
    %v870 = vld [vmem:[%s14] sm:$0xf]
    %v871 = vld [vmem:[%s14 + $0x4] sm:$0xf]
    %v872 = vld [vmem:[%s14 + $0x8] sm:$0xf]
    %v873 = vld [vmem:[%s14 + $0xc] sm:$0xf]
    %v874 = vld [vmem:[%s15] sm:$0x1]
    %v876 = vlaneseq
    %v877 = vshrl.u32 %v876, 7
    %v878 = vsub.s32 0, %v877
    %v879 = vrot.slane %v874, %v878
    %v885 = vunpack.c.l.b16 %v870
    %v886 = vunpack.c.l.b16 %v871
    %v887 = vunpack.c.l.b16 %v872
    %v888 = vunpack.c.l.b16 %v873
    %v889 = vpack.c.b16 %v886, %v885
    %v890 = vpack.c.b16 %v888, %v887
    %v894 = vsel %vm107, %v869, 0
    %896 = vmatprep.subr.bf16.mxu0 0
    %897 = vmatpush1.bf16.msra.mxu0 %v889
    %898 = vmatprep.subr.bf16.mxu0 0
    %899 = vmatpush1.bf16.msra.mxu0 %v890
    %900 = vmatprep.subr.bf16.mxu0 0
    %901 = vmatpush1.bf16.msra.mxu0 0
    %902 = vmatprep.subr.bf16.mxu0 0
    %903 = vmatpush1.bf16.msra.mxu0 0
    %904 = vmatprep.subr.bf16.mxu0 0
    %905 = vmatpush1.bf16.msra.mxu0 0
    %906 = vmatprep.subr.bf16.mxu0 0
    %907 = vmatpush1.bf16.msra.mxu0 0
    %908 = vmatprep.subr.bf16.mxu0 0
    %909 = vmatpush1.bf16.msra.mxu0 0
    %910 = vmatprep.subr.bf16.mxu0 0
    %911 = vmatpush1.bf16.msra.mxu0 0
    %912 = vmatprep.subr.bf16.mxu0 0
    %913 = vmatpush1.bf16.msra.mxu0 0
    %914 = vmatprep.subr.bf16.mxu0 0
    %915 = vmatpush1.bf16.msra.mxu0 0
    %916 = vmatprep.subr.bf16.mxu0 0
    %917 = vmatpush1.bf16.msra.mxu0 0
    %918 = vmatprep.subr.bf16.mxu0 0
    %919 = vmatpush1.bf16.msra.mxu0 0
    %920 = vmatprep.subr.bf16.mxu0 0
    %921 = vmatpush1.bf16.msra.mxu0 0
    %922 = vmatprep.subr.bf16.mxu0 0
    %923 = vmatpush1.bf16.msra.mxu0 0
    %924 = vmatprep.subr.bf16.mxu0 0
    %925 = vmatpush1.bf16.msra.mxu0 0
    %926 = vmatprep.subr.bf16.mxu0 0
    %927 = vmatpush1.bf16.msra.mxu0 0
    %928 = vmatprep.mubr.bf16.mxu0 0
    %929 = vmatmul.mubr.bf16.gmra.mrb[0].mxu0 %v894
    %v930 = vpop.f32.mrb[0].mxu0
    %v931 = vadd.f32 %v879, %v930
    %v932 = vpop.f32.mrb[0].mxu0
    %v933 = vpop.f32.mrb[0].mxu0
    %v934 = vpop.f32.mrb[0].mxu0
    %935 = vdwg.mxu0
    %v936 = vtanh.pop %v931
    %937 = vst.msk [vmem:[#allocation7] sm:$0xff] %vm107, %v936
    // Predicated region
    $region74: #{tpu_custom_call.1} parent=1 // pred_check
      _
    $region75: #{tpu_custom_call.1} parent=1 // pred_check_branch
      %939 = sbr.rel (0) target = $region77
    $region76: #{tpu_custom_call.1} parent=1 // pred_region
      %s941 = ssub.s32 128, 128
      %942 = vsyncadd [#allocation4], %s941
      %s944 = sshll.u32 [#allocation7], 4
      %s945 = int_to_ptr.vmem [resolvable:$true] %s944
      %947 = dma.vmem_to_hbm [thread:$0]  %s945, 128, %s16, [#allocation4]
    $region77: #{tpu_custom_call.1} parent=1 // pred_fallthru
      _
    // Predicated region
    $region78: #{tpu_custom_call.1} parent=1 // pred_check
      _
    $region79: #{tpu_custom_call.1} parent=1 // pred_check_branch
      %949 = sbr.rel (0) target = $region81
    $region80: #{tpu_custom_call.1} parent=1 // pred_region
      %s951 = ssub.s32 128, 128
      %952 = vsyncadd [#allocation9], %s951
      %s954 = sshll.u32 [#allocation8], 4
      %s955 = int_to_ptr.vmem [resolvable:$true] %s954
      %957 = dma.vmem_to_hbm [thread:$0]  %s955, 128, %s17, [#allocation9]
    $region81: #{tpu_custom_call.1} parent=1 // pred_fallthru
      _
    // Predicated region
    $region82: #{tpu_custom_call.1} parent=1 // pred_check
      _
    $region83: #{tpu_custom_call.1} parent=1 // pred_check_branch
      %959 = sbr.rel (0) target = $region85
    $region84: #{tpu_custom_call.1} parent=1 // pred_region
      %960 = dma.done [#allocation4], 128
    $region85: #{tpu_custom_call.1} parent=1 // pred_fallthru
      _
    // Predicated region
    $region86: #{tpu_custom_call.1} parent=1 // pred_check
      _
    $region87: #{tpu_custom_call.1} parent=1 // pred_check_branch
      %962 = sbr.rel (0) target = $region89
    $region88: #{tpu_custom_call.1} parent=1 // pred_region
      %963 = dma.done [#allocation9], 128
    $region89: #{tpu_custom_call.1} parent=1 // pred_fallthru
      _
    %964 = vsyncpa [#allocation3], 1
    %965 = vsyncpa [#allocation6], 1
    %966 = vsyncpa [#allocation4], 1
    %967 = vsyncpa [#allocation9], 1

</llo_original>
